<compile_context>
chip_gen: v6e
topology: v6e:2x2x1
jax: 0.10.0
libtpu: 0.0.40
codegen_flags: <defaults>
</compile_context>

<pallas_src>
from functools import partial

import numpy as np
import jax
import jax.numpy as jnp
from jax import lax
from jax.experimental import pallas as pl
from jax.experimental.pallas import tpu as pltpu

LEAKY_SLOPE = 0.01
BN_EPS = 1e-5
_LANE = 128
_VMEM_LIMIT = 32 * 1024 * 1024  # explicit scoped-VMEM cap (fits v5e/v6e/v7x)


def _round_up(v, m):
    return (v + m - 1) // m * m


# --------------------------------------------------------------------------
# Kernels
# --------------------------------------------------------------------------
def _linear_lrelu_stats_kernel(x_ref, w_ref, b_ref, a_ref, stats_ref, *,
                               tile_n, n_valid, slope):
    """a = leaky_relu(x @ W + b); also emit per-tile sum / sum-of-squares."""
    i = pl.program_id(0)
    h = jnp.dot(x_ref[...], w_ref[...],
                preferred_element_type=jnp.float32) + b_ref[...]      # f32
    a = jnp.where(h > 0, h, slope * h)                                # LeakyReLU, f32
    a_ref[...] = a.astype(a_ref.dtype)

    # Mask batch-padding rows out of the BatchNorm statistics.
    row = lax.broadcasted_iota(jnp.int32, a.shape, 0) + i * tile_n
    am = jnp.where(row < n_valid, a, 0.0)
    stats_ref[0:1, :] = jnp.sum(am, axis=0, keepdims=True)            # sum
    stats_ref[1:2, :] = jnp.sum(am * am, axis=0, keepdims=True)       # sum of squares


def _linear_kernel(x_ref, w_ref, b_ref, y_ref):
    y_ref[...] = (jnp.dot(x_ref[...], w_ref[...],
                          preferred_element_type=jnp.float32)
                  + b_ref[...]).astype(y_ref.dtype)


# --------------------------------------------------------------------------
# pallas_call wrappers (batch-tiled, resident weights)
# --------------------------------------------------------------------------
def _linear_lrelu_stats(x_p, w_p, b_p, *, n_valid, tile_n, act_dtype):
    n_pad, d_in = x_p.shape
    d_out = w_p.shape[1]
    n_tiles = n_pad // tile_n

    flops = 2 * n_pad * d_in * d_out
    bytes_accessed = int(
        x_p.size * x_p.dtype.itemsize
        + w_p.size * w_p.dtype.itemsize
        + b_p.size * b_p.dtype.itemsize
        + n_pad * d_out * np.dtype(act_dtype).itemsize
        + n_tiles * 2 * d_out * 4)

    kernel = partial(_linear_lrelu_stats_kernel,
                     tile_n=tile_n, n_valid=n_valid, slope=LEAKY_SLOPE)
    return pl.pallas_call(
        kernel,
        grid=(n_tiles,),
        in_specs=[
            pl.BlockSpec((tile_n, d_in), lambda i: (i, 0)),    # streamed batch tile
            pl.BlockSpec((d_in, d_out), lambda i: (0, 0)),     # resident weights
            pl.BlockSpec((1, d_out), lambda i: (0, 0)),        # resident bias
        ],
        out_specs=[
            pl.BlockSpec((tile_n, d_out), lambda i: (i, 0)),         # activations
            pl.BlockSpec((None, 2, d_out), lambda i: (i, 0, 0)),     # per-tile stats
        ],
        out_shape=[
            jax.ShapeDtypeStruct((n_pad, d_out), act_dtype),
            jax.ShapeDtypeStruct((n_tiles, 2, d_out), jnp.float32),
        ],
        compiler_params=pltpu.CompilerParams(
            dimension_semantics=("parallel",),
            vmem_limit_bytes=_VMEM_LIMIT),
        cost_estimate=pl.CostEstimate(flops=flops, transcendentals=0,
                                      bytes_accessed=bytes_accessed),
    )(x_p, w_p, b_p)


def _linear(x_p, w_p, b_p, *, tile_n):
    n_pad, d_in = x_p.shape
    d_out = w_p.shape[1]
    n_tiles = n_pad // tile_n

    flops = 2 * n_pad * d_in * d_out
    bytes_accessed = int(
        x_p.size * x_p.dtype.itemsize
        + w_p.size * w_p.dtype.itemsize
        + b_p.size * b_p.dtype.itemsize
        + n_pad * d_out * 4)

    return pl.pallas_call(
        _linear_kernel,
        grid=(n_tiles,),
        in_specs=[
            pl.BlockSpec((tile_n, d_in), lambda i: (i, 0)),
            pl.BlockSpec((d_in, d_out), lambda i: (0, 0)),
            pl.BlockSpec((1, d_out), lambda i: (0, 0)),
        ],
        out_specs=pl.BlockSpec((tile_n, d_out), lambda i: (i, 0)),   # lane-dense (128)
        out_shape=jax.ShapeDtypeStruct((n_pad, d_out), jnp.float32),
        compiler_params=pltpu.CompilerParams(
            dimension_semantics=("parallel",),
            vmem_limit_bytes=_VMEM_LIMIT),
        cost_estimate=pl.CostEstimate(flops=flops, transcendentals=0,
                                      bytes_accessed=bytes_accessed),
    )(x_p, w_p, b_p)


# --------------------------------------------------------------------------
# Host-side helpers
# --------------------------------------------------------------------------
def _pad2(a, rows, cols):
    out = jnp.zeros((rows, cols), jnp.float32)
    return out.at[:a.shape[0], :a.shape[1]].set(a.astype(jnp.float32))


def _bn_scale_shift(stats, n, gamma, beta, d_real, d_pad):
    """Combine per-tile stats into the folded BN scale/shift (f32, padded)."""
    s = jnp.sum(stats[:, 0, :], axis=0)
    ss = jnp.sum(stats[:, 1, :], axis=0)
    mean = s / n
    # single-pass biased variance; clamp guards f32 cancellation
    var = jnp.maximum(ss / n - mean * mean, 0.0)
    g = jnp.zeros((d_pad,), jnp.float32).at[:d_real].set(gamma.reshape(-1))
    b = jnp.zeros((d_pad,), jnp.float32).at[:d_real].set(beta.reshape(-1))
    scale = g * lax.rsqrt(var + BN_EPS)          # zero in padded columns
    shift = b - mean * scale
    return scale, shift


def feed_forward_net(x, params, *, tile_n=512, mxu_dtype=jnp.bfloat16):
    """Forward pass. x: (N, D_in) float32. Returns (N, D_out) float32."""
    (w1, b1, g1, be1, w2, b2, g2, be2, w3, b3) = params
    N, d_in = x.shape
    h1_d, h2_d, d_out = w1.shape[1], w2.shape[1], w3.shape[1]
    h1p = _round_up(h1_d, _LANE)
    h2p = _round_up(h2_d, _LANE)
    d_outp = _round_up(d_out, _LANE)
    hp = jax.lax.Precision.HIGHEST

    # batch tile: multiple of 16 sublanes (bf16 packing), clamped to padded N
    tile_n = _round_up(min(tile_n, _round_up(N, 16)), 16)
    n_pad = _round_up(N, tile_n)

    # zero-pad batch and feature dims (lane-dense 128-multiples)
    x_p = jnp.zeros((n_pad, d_in), jnp.float32).at[:N].set(x).astype(mxu_dtype)
    w1p = _pad2(w1, d_in, h1p)
    b1p = _pad2(b1.reshape(1, -1), 1, h1p)
    w2p = _pad2(w2, h1p, h2p)
    b2p = _pad2(b2.reshape(1, -1), 1, h2p)
    w3p = _pad2(w3, h2p, d_outp)
    b3p = _pad2(b3.reshape(1, -1), 1, d_outp)

    # ---- layer 1: linear + leaky_relu, accumulate BN1 stats ----
    a1, st1 = _linear_lrelu_stats(x_p, w1p.astype(mxu_dtype), b1p,
                                  n_valid=N, tile_n=tile_n, act_dtype=mxu_dtype)
    s1, t1 = _bn_scale_shift(st1, N, g1, be1, h1_d, h1p)
    # fold BN1 into layer-2 params: (a1*s1 + t1) @ W2 + b2 == a1 @ (s1*W2) + (t1@W2 + b2)
    w2f = (s1[:, None] * w2p).astype(mxu_dtype)
    b2f = jnp.dot(t1, w2p, precision=hp)[None, :] + b2p

    # ---- layer 2: linear + leaky_relu, accumulate BN2 stats ----
    a2, st2 = _linear_lrelu_stats(a1, w2f, b2f,
                                  n_valid=N, tile_n=tile_n, act_dtype=mxu_dtype)
    s2, t2 = _bn_scale_shift(st2, N, g2, be2, h2_d, h2p)
    w3f = (s2[:, None] * w3p).astype(mxu_dtype)
    b3f = jnp.dot(t2, w3p, precision=hp)[None, :] + b3p

    # ---- layer 3: final linear (lane-dense padded output) ----
    y_p = _linear(a2, w3f, b3f, tile_n=tile_n)
    return y_p[:N, :d_out]


def init_params(key, d_in, h1, h2, d_out):
    """Deterministic PyTorch-style init: U(-1/sqrt(fan_in), 1/sqrt(fan_in))."""
    ks = jax.random.split(key, 6)

    def lin(kw, kb, fan_in, fan_out):
        bound = 1.0 / jnp.sqrt(jnp.float32(fan_in))
        w = jax.random.uniform(kw, (fan_in, fan_out), jnp.float32, -bound, bound)
        b = jax.random.uniform(kb, (1, fan_out), jnp.float32, -bound, bound)
        return w, b

    w1, b1 = lin(ks[0], ks[1], d_in, h1)
    w2, b2 = lin(ks[2], ks[3], h1, h2)
    w3, b3 = lin(ks[4], ks[5], h2, d_out)
    # BatchNorm affine params at PyTorch init: gamma=1, beta=0
    g1, be1 = jnp.ones((1, h1), jnp.float32), jnp.zeros((1, h1), jnp.float32)
    g2, be2 = jnp.ones((1, h2), jnp.float32), jnp.zeros((1, h2), jnp.float32)
    return (w1, b1, g1, be1, w2, b2, g2, be2, w3, b3)


def _reference(x, params):
    """Pure-JAX f32 reference (matches the PyTorch module in training mode)."""
    (w1, b1, g1, be1, w2, b2, g2, be2, w3, b3) = params
    hp = jax.lax.Precision.HIGHEST

    def bn(h, g, be):
        m = jnp.mean(h, axis=0, keepdims=True)
        v = jnp.mean((h - m) ** 2, axis=0, keepdims=True)   # biased variance
        return (h - m) / jnp.sqrt(v + BN_EPS) * g + be

    def lrelu(h):
        return jnp.where(h > 0, h, LEAKY_SLOPE * h)

    h1 = bn(lrelu(jnp.dot(x, w1, precision=hp) + b1), g1, be1)
    h2 = bn(lrelu(jnp.dot(h1, w2, precision=hp) + b2), g2, be2)
    return jnp.dot(h2, w3, precision=hp) + b3


if __name__ == "__main__":
    # Shapes from the spec: H1=20, H2=10, D_out=2; D_in is data-dependent -> 16.
    D_in, H1, H2, D_out = 16, 20, 10, 2
    N = 200          # not a multiple of the tile -> exercises masking of padded rows
    TILE_N = 128     # 2 grid steps

    key = jax.random.PRNGKey(0)
    kx, kp = jax.random.split(key)
    x = jax.random.normal(kx, (N, D_in), jnp.float32)
    params = init_params(kp, D_in, H1, H2, D_out)

    fwd = jax.jit(feed_forward_net, static_argnames=("tile_n", "mxu_dtype"))
    y = fwd(x, params, tile_n=TILE_N, mxu_dtype=jnp.bfloat16)
    y = jax.block_until_ready(y)

    y_ref = _reference(x, params)
    assert y.shape == (N, D_out)
    # bf16 MXU operands (f32 accumulation) vs pure-f32 reference -> loosened tol.
    max_err = float(jnp.max(jnp.abs(y - y_ref)))
    assert jnp.allclose(y, y_ref, atol=5e-2, rtol=5e-2), f"max |err| = {max_err}"

    print("KERNEL_OK")
</pallas_src>

<mosaic_0001>
module attributes {stable_mosaic.version = 11 : i64} {
  func.func @_linear_lrelu_stats_kernel(%arg0: i32, %arg1: memref<128x16xbf16, #tpu.memory_space<vmem>>, %arg2: memref<16x128xbf16, #tpu.memory_space<vmem>>, %arg3: memref<1x128xf32, #tpu.memory_space<vmem>>, %arg4: memref<128x128xbf16, #tpu.memory_space<vmem>>, %arg5: memref<1x2x128xf32, #tpu.memory_space<vmem>>) attributes {dimension_semantics = [#tpu.dimension_semantics<parallel>], iteration_bounds = array<i64: 2>, scalar_prefetch = 0 : i64, scratch_operands = 0 : i64, tpu.core_type = #tpu.core_type<tc>, window_params = [{transform_indices = @transform_0, window_bounds = array<i64: 128, 16>}, {pipeline_mode = #tpu.pipeline_mode<synchronous>, transform_indices = @transform_1, window_bounds = array<i64: 16, 128>}, {pipeline_mode = #tpu.pipeline_mode<synchronous>, transform_indices = @transform_2, window_bounds = array<i64: 1, 128>}, {transform_indices = @transform_3, window_bounds = array<i64: 128, 128>}, {transform_indices = @transform_4, window_bounds = array<i64: 1, 2, 128>}]} {
    %c0 = arith.constant 0 : index
    %c0_0 = arith.constant 0 : index
    %0 = vector.load %arg1[%c0, %c0_0] : memref<128x16xbf16, #tpu.memory_space<vmem>>, vector<128x16xbf16>
    %c0_1 = arith.constant 0 : index
    %c0_2 = arith.constant 0 : index
    %1 = vector.load %arg2[%c0_1, %c0_2] : memref<16x128xbf16, #tpu.memory_space<vmem>>, vector<16x128xbf16>
    %cst = arith.constant dense<0.000000e+00> : vector<128x128xf32>
    %2 = tpu.matmul %0, %1, %cst {dimension_numbers = #tpu.dot_dimension_numbers<[1], [0], [0], [1], [0, 0, 1, 1], [], []>} : vector<128x16xbf16>, vector<16x128xbf16>, vector<128x128xf32> -> vector<128x128xf32>
    %c0_3 = arith.constant 0 : index
    %c0_4 = arith.constant 0 : index
    %3 = vector.load %arg3[%c0_3, %c0_4] : memref<1x128xf32, #tpu.memory_space<vmem>>, vector<1x128xf32>
    %4 = vector.broadcast %3 : vector<1x128xf32> to vector<128x128xf32>
    %5 = arith.addf %2, %4 : vector<128x128xf32>
    %cst_5 = arith.constant 0.000000e+00 : f32
    %6 = vector.broadcast %cst_5 : f32 to vector<128x128xf32>
    %7 = arith.cmpf ogt, %5, %6 : vector<128x128xf32>
    %cst_6 = arith.constant 0.00999999977 : f32
    %8 = vector.broadcast %cst_6 : f32 to vector<128x128xf32>
    %9 = arith.mulf %8, %5 : vector<128x128xf32>
    %10 = arith.select %7, %5, %9 : vector<128x128xi1>, vector<128x128xf32>
    %11 = arith.truncf %10 : vector<128x128xf32> to vector<128x128xbf16>
    %c0_7 = arith.constant 0 : index
    %c0_8 = arith.constant 0 : index
    %12 = vector.load %arg4[%c0_7, %c0_8] : memref<128x128xbf16, #tpu.memory_space<vmem>>, vector<128x128xbf16>
    tpu.vector_store %arg4[%c0_7, %c0_8], %11 {strides = array<i32>} : memref<128x128xbf16, #tpu.memory_space<vmem>>, vector<128x128xbf16>,
    %13 = tpu.iota {dimensions = array<i32: 0>} : vector<128x128xi32>
    %c128_i32 = arith.constant 128 : i32
    %14 = arith.muli %arg0, %c128_i32 : i32
    %15 = vector.broadcast %14 : i32 to vector<128x128xi32>
    %16 = arith.addi %13, %15 : vector<128x128xi32>
    %c200_i32 = arith.constant 200 : i32
    %17 = vector.broadcast %c200_i32 : i32 to vector<128x128xi32>
    %18 = arith.cmpi slt, %16, %17 : vector<128x128xi32>
    %cst_9 = arith.constant 0.000000e+00 : f32
    %19 = vector.broadcast %cst_9 : f32 to vector<128x128xf32>
    %20 = arith.select %18, %10, %19 : vector<128x128xi1>, vector<128x128xf32>
    %cst_10 = arith.constant dense<0.000000e+00> : vector<128xf32>
    %21 = vector.multi_reduction <add>, %20, %cst_10 [0] : vector<128x128xf32> to vector<128xf32>
    %22 = vector.shape_cast %21 : vector<128xf32> to vector<1x128xf32>
    %c0_11 = arith.constant 0 : index
    %c0_12 = arith.constant 0 : index
    %c0_13 = arith.constant 0 : index
    %23 = vector.load %arg5[%c0_11, %c0_12, %c0_13] : memref<1x2x128xf32, #tpu.memory_space<vmem>>, vector<1x1x128xf32>
    %24 = vector.shape_cast %23 : vector<1x1x128xf32> to vector<1x128xf32>
    %25 = vector.shape_cast %22 : vector<1x128xf32> to vector<1x1x128xf32>
    tpu.vector_store %arg5[%c0_11, %c0_12, %c0_13], %25 {strides = array<i32>} : memref<1x2x128xf32, #tpu.memory_space<vmem>>, vector<1x1x128xf32>,
    %26 = arith.mulf %20, %20 : vector<128x128xf32>
    %cst_14 = arith.constant dense<0.000000e+00> : vector<128xf32>
    %27 = vector.multi_reduction <add>, %26, %cst_14 [0] : vector<128x128xf32> to vector<128xf32>
    %28 = vector.shape_cast %27 : vector<128xf32> to vector<1x128xf32>
    %c0_15 = arith.constant 0 : index
    %c1 = arith.constant 1 : index
    %c0_16 = arith.constant 0 : index
    %29 = vector.load %arg5[%c0_15, %c1, %c0_16] : memref<1x2x128xf32, #tpu.memory_space<vmem>>, vector<1x1x128xf32>
    %30 = vector.shape_cast %29 : vector<1x1x128xf32> to vector<1x128xf32>
    %31 = vector.shape_cast %28 : vector<1x128xf32> to vector<1x1x128xf32>
    tpu.vector_store %arg5[%c0_15, %c1, %c0_16], %31 {strides = array<i32>} : memref<1x2x128xf32, #tpu.memory_space<vmem>>, vector<1x1x128xf32>,
    return
  }
  func.func @transform_0(%arg0: i32) -> (i32, i32) {
    %c0_i32 = arith.constant 0 : i32
    %c0_i32_0 = arith.constant 0 : i32
    return %arg0, %c0_i32 : i32, i32
  }
  func.func @transform_1(%arg0: i32) -> (i32, i32) {
    %c0_i32 = arith.constant 0 : i32
    %c0_i32_0 = arith.constant 0 : i32
    %c0_i32_1 = arith.constant 0 : i32
    return %c0_i32, %c0_i32_0 : i32, i32
  }
  func.func @transform_2(%arg0: i32) -> (i32, i32) {
    %c0_i32 = arith.constant 0 : i32
    %c0_i32_0 = arith.constant 0 : i32
    %c0_i32_1 = arith.constant 0 : i32
    return %c0_i32, %c0_i32_0 : i32, i32
  }
  func.func @transform_3(%arg0: i32) -> (i32, i32) {
    %c0_i32 = arith.constant 0 : i32
    %c0_i32_0 = arith.constant 0 : i32
    return %arg0, %c0_i32 : i32, i32
  }
  func.func @transform_4(%arg0: i32) -> (i32, i32, i32) {
    %c0_i32 = arith.constant 0 : i32
    %c0_i32_0 = arith.constant 0 : i32
    %c0_i32_1 = arith.constant 0 : i32
    return %arg0, %c0_i32, %c0_i32_0 : i32, i32, i32
  }
}

module attributes {stable_mosaic.version = 11 : i64} {
  func.func @_linear_lrelu_stats_kernel(%arg0: i32, %arg1: memref<128x128xbf16, #tpu.memory_space<vmem>>, %arg2: memref<128x128xbf16, #tpu.memory_space<vmem>>, %arg3: memref<1x128xf32, #tpu.memory_space<vmem>>, %arg4: memref<128x128xbf16, #tpu.memory_space<vmem>>, %arg5: memref<1x2x128xf32, #tpu.memory_space<vmem>>) attributes {dimension_semantics = [#tpu.dimension_semantics<parallel>], iteration_bounds = array<i64: 2>, scalar_prefetch = 0 : i64, scratch_operands = 0 : i64, tpu.core_type = #tpu.core_type<tc>, window_params = [{transform_indices = @transform_0, window_bounds = array<i64: 128, 128>}, {pipeline_mode = #tpu.pipeline_mode<synchronous>, transform_indices = @transform_1, window_bounds = array<i64: 128, 128>}, {pipeline_mode = #tpu.pipeline_mode<synchronous>, transform_indices = @transform_2, window_bounds = array<i64: 1, 128>}, {transform_indices = @transform_3, window_bounds = array<i64: 128, 128>}, {transform_indices = @transform_4, window_bounds = array<i64: 1, 2, 128>}]} {
    %c0 = arith.constant 0 : index
    %c0_0 = arith.constant 0 : index
    %0 = vector.load %arg1[%c0, %c0_0] : memref<128x128xbf16, #tpu.memory_space<vmem>>, vector<128x128xbf16>
    %c0_1 = arith.constant 0 : index
    %c0_2 = arith.constant 0 : index
    %1 = vector.load %arg2[%c0_1, %c0_2] : memref<128x128xbf16, #tpu.memory_space<vmem>>, vector<128x128xbf16>
    %cst = arith.constant dense<0.000000e+00> : vector<128x128xf32>
    %2 = tpu.matmul %0, %1, %cst {dimension_numbers = #tpu.dot_dimension_numbers<[1], [0], [0], [1], [0, 0, 1, 1], [], []>} : vector<128x128xbf16>, vector<128x128xbf16>, vector<128x128xf32> -> vector<128x128xf32>
    %c0_3 = arith.constant 0 : index
    %c0_4 = arith.constant 0 : index
    %3 = vector.load %arg3[%c0_3, %c0_4] : memref<1x128xf32, #tpu.memory_space<vmem>>, vector<1x128xf32>
    %4 = vector.broadcast %3 : vector<1x128xf32> to vector<128x128xf32>
    %5 = arith.addf %2, %4 : vector<128x128xf32>
    %cst_5 = arith.constant 0.000000e+00 : f32
    %6 = vector.broadcast %cst_5 : f32 to vector<128x128xf32>
    %7 = arith.cmpf ogt, %5, %6 : vector<128x128xf32>
    %cst_6 = arith.constant 0.00999999977 : f32
    %8 = vector.broadcast %cst_6 : f32 to vector<128x128xf32>
    %9 = arith.mulf %8, %5 : vector<128x128xf32>
    %10 = arith.select %7, %5, %9 : vector<128x128xi1>, vector<128x128xf32>
    %11 = arith.truncf %10 : vector<128x128xf32> to vector<128x128xbf16>
    %c0_7 = arith.constant 0 : index
    %c0_8 = arith.constant 0 : index
    %12 = vector.load %arg4[%c0_7, %c0_8] : memref<128x128xbf16, #tpu.memory_space<vmem>>, vector<128x128xbf16>
    tpu.vector_store %arg4[%c0_7, %c0_8], %11 {strides = array<i32>} : memref<128x128xbf16, #tpu.memory_space<vmem>>, vector<128x128xbf16>,
    %13 = tpu.iota {dimensions = array<i32: 0>} : vector<128x128xi32>
    %c128_i32 = arith.constant 128 : i32
    %14 = arith.muli %arg0, %c128_i32 : i32
    %15 = vector.broadcast %14 : i32 to vector<128x128xi32>
    %16 = arith.addi %13, %15 : vector<128x128xi32>
    %c200_i32 = arith.constant 200 : i32
    %17 = vector.broadcast %c200_i32 : i32 to vector<128x128xi32>
    %18 = arith.cmpi slt, %16, %17 : vector<128x128xi32>
    %cst_9 = arith.constant 0.000000e+00 : f32
    %19 = vector.broadcast %cst_9 : f32 to vector<128x128xf32>
    %20 = arith.select %18, %10, %19 : vector<128x128xi1>, vector<128x128xf32>
    %cst_10 = arith.constant dense<0.000000e+00> : vector<128xf32>
    %21 = vector.multi_reduction <add>, %20, %cst_10 [0] : vector<128x128xf32> to vector<128xf32>
    %22 = vector.shape_cast %21 : vector<128xf32> to vector<1x128xf32>
    %c0_11 = arith.constant 0 : index
    %c0_12 = arith.constant 0 : index
    %c0_13 = arith.constant 0 : index
    %23 = vector.load %arg5[%c0_11, %c0_12, %c0_13] : memref<1x2x128xf32, #tpu.memory_space<vmem>>, vector<1x1x128xf32>
    %24 = vector.shape_cast %23 : vector<1x1x128xf32> to vector<1x128xf32>
    %25 = vector.shape_cast %22 : vector<1x128xf32> to vector<1x1x128xf32>
    tpu.vector_store %arg5[%c0_11, %c0_12, %c0_13], %25 {strides = array<i32>} : memref<1x2x128xf32, #tpu.memory_space<vmem>>, vector<1x1x128xf32>,
    %26 = arith.mulf %20, %20 : vector<128x128xf32>
    %cst_14 = arith.constant dense<0.000000e+00> : vector<128xf32>
    %27 = vector.multi_reduction <add>, %26, %cst_14 [0] : vector<128x128xf32> to vector<128xf32>
    %28 = vector.shape_cast %27 : vector<128xf32> to vector<1x128xf32>
    %c0_15 = arith.constant 0 : index
    %c1 = arith.constant 1 : index
    %c0_16 = arith.constant 0 : index
    %29 = vector.load %arg5[%c0_15, %c1, %c0_16] : memref<1x2x128xf32, #tpu.memory_space<vmem>>, vector<1x1x128xf32>
    %30 = vector.shape_cast %29 : vector<1x1x128xf32> to vector<1x128xf32>
    %31 = vector.shape_cast %28 : vector<1x128xf32> to vector<1x1x128xf32>
    tpu.vector_store %arg5[%c0_15, %c1, %c0_16], %31 {strides = array<i32>} : memref<1x2x128xf32, #tpu.memory_space<vmem>>, vector<1x1x128xf32>,
    return
  }
  func.func @transform_0(%arg0: i32) -> (i32, i32) {
    %c0_i32 = arith.constant 0 : i32
    %c0_i32_0 = arith.constant 0 : i32
    return %arg0, %c0_i32 : i32, i32
  }
  func.func @transform_1(%arg0: i32) -> (i32, i32) {
    %c0_i32 = arith.constant 0 : i32
    %c0_i32_0 = arith.constant 0 : i32
    %c0_i32_1 = arith.constant 0 : i32
    return %c0_i32, %c0_i32_0 : i32, i32
  }
  func.func @transform_2(%arg0: i32) -> (i32, i32) {
    %c0_i32 = arith.constant 0 : i32
    %c0_i32_0 = arith.constant 0 : i32
    %c0_i32_1 = arith.constant 0 : i32
    return %c0_i32, %c0_i32_0 : i32, i32
  }
  func.func @transform_3(%arg0: i32) -> (i32, i32) {
    %c0_i32 = arith.constant 0 : i32
    %c0_i32_0 = arith.constant 0 : i32
    return %arg0, %c0_i32 : i32, i32
  }
  func.func @transform_4(%arg0: i32) -> (i32, i32, i32) {
    %c0_i32 = arith.constant 0 : i32
    %c0_i32_0 = arith.constant 0 : i32
    %c0_i32_1 = arith.constant 0 : i32
    return %arg0, %c0_i32, %c0_i32_0 : i32, i32, i32
  }
}

module attributes {stable_mosaic.version = 11 : i64} {
  func.func @_linear_kernel(%arg0: i32, %arg1: memref<128x128xbf16, #tpu.memory_space<vmem>>, %arg2: memref<128x128xbf16, #tpu.memory_space<vmem>>, %arg3: memref<1x128xf32, #tpu.memory_space<vmem>>, %arg4: memref<128x128xf32, #tpu.memory_space<vmem>>) attributes {dimension_semantics = [#tpu.dimension_semantics<parallel>], iteration_bounds = array<i64: 2>, scalar_prefetch = 0 : i64, scratch_operands = 0 : i64, tpu.core_type = #tpu.core_type<tc>, window_params = [{transform_indices = @transform_0, window_bounds = array<i64: 128, 128>}, {pipeline_mode = #tpu.pipeline_mode<synchronous>, transform_indices = @transform_1, window_bounds = array<i64: 128, 128>}, {pipeline_mode = #tpu.pipeline_mode<synchronous>, transform_indices = @transform_2, window_bounds = array<i64: 1, 128>}, {transform_indices = @transform_3, window_bounds = array<i64: 128, 128>}]} {
    %c0 = arith.constant 0 : index
    %c0_0 = arith.constant 0 : index
    %0 = vector.load %arg1[%c0, %c0_0] : memref<128x128xbf16, #tpu.memory_space<vmem>>, vector<128x128xbf16>
    %c0_1 = arith.constant 0 : index
    %c0_2 = arith.constant 0 : index
    %1 = vector.load %arg2[%c0_1, %c0_2] : memref<128x128xbf16, #tpu.memory_space<vmem>>, vector<128x128xbf16>
    %cst = arith.constant dense<0.000000e+00> : vector<128x128xf32>
    %2 = tpu.matmul %0, %1, %cst {dimension_numbers = #tpu.dot_dimension_numbers<[1], [0], [0], [1], [0, 0, 1, 1], [], []>} : vector<128x128xbf16>, vector<128x128xbf16>, vector<128x128xf32> -> vector<128x128xf32>
    %c0_3 = arith.constant 0 : index
    %c0_4 = arith.constant 0 : index
    %3 = vector.load %arg3[%c0_3, %c0_4] : memref<1x128xf32, #tpu.memory_space<vmem>>, vector<1x128xf32>
    %4 = vector.broadcast %3 : vector<1x128xf32> to vector<128x128xf32>
    %5 = arith.addf %2, %4 : vector<128x128xf32>
    %c0_5 = arith.constant 0 : index
    %c0_6 = arith.constant 0 : index
    %6 = vector.load %arg4[%c0_5, %c0_6] : memref<128x128xf32, #tpu.memory_space<vmem>>, vector<128x128xf32>
    tpu.vector_store %arg4[%c0_5, %c0_6], %5 {strides = array<i32>} : memref<128x128xf32, #tpu.memory_space<vmem>>, vector<128x128xf32>,
    return
  }
  func.func @transform_0(%arg0: i32) -> (i32, i32) {
    %c0_i32 = arith.constant 0 : i32
    %c0_i32_0 = arith.constant 0 : i32
    return %arg0, %c0_i32 : i32, i32
  }
  func.func @transform_1(%arg0: i32) -> (i32, i32) {
    %c0_i32 = arith.constant 0 : i32
    %c0_i32_0 = arith.constant 0 : i32
    %c0_i32_1 = arith.constant 0 : i32
    return %c0_i32, %c0_i32_0 : i32, i32
  }
  func.func @transform_2(%arg0: i32) -> (i32, i32) {
    %c0_i32 = arith.constant 0 : i32
    %c0_i32_0 = arith.constant 0 : i32
    %c0_i32_1 = arith.constant 0 : i32
    return %c0_i32, %c0_i32_0 : i32, i32
  }
  func.func @transform_3(%arg0: i32) -> (i32, i32) {
    %c0_i32 = arith.constant 0 : i32
    %c0_i32_0 = arith.constant 0 : i32
    return %arg0, %c0_i32 : i32, i32
  }
}

</mosaic_0001>

<llo_original>
// kernel: feed_forward_net.3
$region0: #{feed_forward_net.3}
  #allocation0 [shape = 'u32[]', space=smem, size = 0x4, offset = 0x4, fixed_abs, tag = 'smem constant byte address 0x4 - core index']
  #allocation1 [shape = 'u32[144,128]{1,0:T(1,128)}', space=vmem, size = 0x12000, scoped, tag = 'internal scratch']
  %s0 = inlined_call_operand.vmem [shape: bf16[256,16], index: 0, kind: input, shape index: {}]
  %s1 = inlined_call_operand.vmem [shape: bf16[16,128], index: 1, kind: input, shape index: {}]
  %s2 = inlined_call_operand.vmem [shape: f32[1,128], index: 2, kind: input, shape index: {}]
  %s3 = inlined_call_operand.vmem [shape: bf16[256,128], index: 3, kind: output, shape index: {0}]
  %s4 = inlined_call_operand.vmem [shape: f32[2,2,128], index: 4, kind: output, shape index: {1}]
  %5 = xla_tuple %s3, %s4
  %s6 = sld [smem:[#allocation0]]
  $region53: #{feed_forward_net.3} parent=0
    _
  %s8 = ssub.s32 1, %s6
  %s9 = scalar_select 0, %s8, %s6
  loop: start=0, step=1, limit=4
  $region2: #{feed_forward_net.3} parent=0 // loop_pre_header
    _
  $region3: #{feed_forward_net.3} parent=0 // loop_header
    %s11 = sphi 0, %s15
    %p12 = scmp.ge.s32.totalorder %s11, 4
    %s21 = sphi 0, %s23
    %s24 = sphi 0, %s21
    %s25 = sphi 0, %s24
    %s41 = sphi 0, %s25
    %s45 = sphi 0, %s45
    %s47 = sphi 0, %s45
    %s48 = sphi 0, %s47
    %s62 = sphi 0, %s48
    %s66 = sphi 0, %s66
    %s68 = sphi 0, %s66
    %s69 = sphi 0, %s68
    %s83 = sphi 0, %s69
    %s89 = sphi 0, %s91
    %s92 = sphi 0, %s89
    %s93 = sphi 0, %s92
    %s109 = sphi 0, %s93
    %s115 = sphi 0, %s117
    %s118 = sphi 0, %s115
    %s119 = sphi 0, %s118
    %s135 = sphi 0, %s119
  $region4: #{feed_forward_net.3} parent=0 // loop_header_branch
    %14 = sbr.rel (%p12) target = $region8
  $region5: #{feed_forward_net.3} parent=0 // loop_body
    %s16 = ssub.s32 %s11, 1
    %s17 = ssub.s32 %s11, 2
    %s18 = sadd.s32 %s11, 1
    %s19 = ssub.s32 %s11, %s18
    %p20 = scmp.eq.s32.totalorder %s19, 0
    %s22 = sadd.s32 %s21, 1
    %s23 = scalar_select %p20, %s21, %s22
    %p26 = pneg %p20
    %p27 = scmp.eq.s32.totalorder %s11, 1
    %p28 = por %p26, %p27
    %p29 = scmp.ne.s32.totalorder %s21, %s24
    %p30 = scmp.eq.s32.totalorder %s11, 0
    %p31 = por %p29, %p30
    %p32 = scmp.ne.s32.totalorder %s21, %s24
    %p33 = scmp.eq.s32.totalorder %s16, 1
    %p34 = por %p32, %p33
    %p35 = scmp.ne.s32.totalorder %s24, %s25
    %p36 = scmp.eq.s32.totalorder %s16, 0
    %p37 = por %p35, %p36
    %p38 = scmp.ne.s32.totalorder %s24, %s25
    %p39 = scmp.eq.s32.totalorder %s17, 1
    %p40 = por %p38, %p39
    %p42 = scmp.ne.s32.totalorder %s25, %s41
    %p43 = scmp.eq.s32.totalorder %s17, 0
    %p44 = por %p42, %p43
    %s46 = sadd.s32 %s45, 1
    %p49 = scmp.eq.s32.totalorder %s11, 1
    %p50 = scmp.ne.s32.totalorder %s45, %s47
    %p51 = scmp.eq.s32.totalorder %s11, 0
    %p52 = por %p50, %p51
    %p53 = scmp.ne.s32.totalorder %s45, %s47
    %p54 = scmp.eq.s32.totalorder %s16, 1
    %p55 = por %p53, %p54
    %p56 = scmp.ne.s32.totalorder %s47, %s48
    %p57 = scmp.eq.s32.totalorder %s16, 0
    %p58 = por %p56, %p57
    %p59 = scmp.ne.s32.totalorder %s47, %s48
    %p60 = scmp.eq.s32.totalorder %s17, 1
    %p61 = por %p59, %p60
    %p63 = scmp.ne.s32.totalorder %s48, %s62
    %p64 = scmp.eq.s32.totalorder %s17, 0
    %p65 = por %p63, %p64
    %s67 = sadd.s32 %s66, 1
    %p70 = scmp.eq.s32.totalorder %s11, 1
    %p71 = scmp.ne.s32.totalorder %s66, %s68
    %p72 = scmp.eq.s32.totalorder %s11, 0
    %p73 = por %p71, %p72
    %p74 = scmp.ne.s32.totalorder %s66, %s68
    %p75 = scmp.eq.s32.totalorder %s16, 1
    %p76 = por %p74, %p75
    %p77 = scmp.ne.s32.totalorder %s68, %s69
    %p78 = scmp.eq.s32.totalorder %s16, 0
    %p79 = por %p77, %p78
    %p80 = scmp.ne.s32.totalorder %s68, %s69
    %p81 = scmp.eq.s32.totalorder %s17, 1
    %p82 = por %p80, %p81
    %p84 = scmp.ne.s32.totalorder %s69, %s83
    %p85 = scmp.eq.s32.totalorder %s17, 0
    %p86 = por %p84, %p85
    %s87 = ssub.s32 %s11, %s18
    %p88 = scmp.eq.s32.totalorder %s87, 0
    %s90 = sadd.s32 %s89, 1
    %s91 = scalar_select %p88, %s89, %s90
    %p94 = pneg %p88
    %p95 = scmp.eq.s32.totalorder %s11, 1
    %p96 = por %p94, %p95
    %p97 = scmp.ne.s32.totalorder %s89, %s92
    %p98 = scmp.eq.s32.totalorder %s11, 0
    %p99 = por %p97, %p98
    %p100 = scmp.ne.s32.totalorder %s89, %s92
    %p101 = scmp.eq.s32.totalorder %s16, 1
    %p102 = por %p100, %p101
    %p103 = scmp.ne.s32.totalorder %s92, %s93
    %p104 = scmp.eq.s32.totalorder %s16, 0
    %p105 = por %p103, %p104
    %p106 = scmp.ne.s32.totalorder %s92, %s93
    %p107 = scmp.eq.s32.totalorder %s17, 1
    %p108 = por %p106, %p107
    %p110 = scmp.ne.s32.totalorder %s93, %s109
    %p111 = scmp.eq.s32.totalorder %s17, 0
    %p112 = por %p110, %p111
    %s113 = ssub.s32 %s11, %s18
    %p114 = scmp.eq.s32.totalorder %s113, 0
    %s116 = sadd.s32 %s115, 1
    %s117 = scalar_select %p114, %s115, %s116
    %p120 = pneg %p114
    %p121 = scmp.eq.s32.totalorder %s11, 1
    %p122 = por %p120, %p121
    %p123 = scmp.ne.s32.totalorder %s115, %s118
    %p124 = scmp.eq.s32.totalorder %s11, 0
    %p125 = por %p123, %p124
    %p126 = scmp.ne.s32.totalorder %s115, %s118
    %p127 = scmp.eq.s32.totalorder %s16, 1
    %p128 = por %p126, %p127
    %p129 = scmp.ne.s32.totalorder %s118, %s119
    %p130 = scmp.eq.s32.totalorder %s16, 0
    %p131 = por %p129, %p130
    %p132 = scmp.ne.s32.totalorder %s118, %s119
    %p133 = scmp.eq.s32.totalorder %s17, 1
    %p134 = por %p132, %p133
    %p136 = scmp.ne.s32.totalorder %s119, %s135
    %p137 = scmp.eq.s32.totalorder %s17, 0
    %p138 = por %p136, %p137
    %p139 = scmp.le.s32.totalorder 1, %s11
    %p140 = scmp.lt.s32.totalorder %s11, 3
    %p141 = pnand %p139, %p140
    %p142 = pneg %p141
    // Predicated region
    $region9: #{feed_forward_net.3} parent=5 // pred_check
      _
    $region10: #{feed_forward_net.3} parent=5 // pred_check_branch
      %144 = sbr.rel (%p141) target = $region12
    $region11: #{feed_forward_net.3} parent=5 // pred_region
      %s145 = ssub.s32 %s11, 1
      // Predicated region
      $region13: #{feed_forward_net.3} parent=11 // pred_check
        %p146 = pneg %p58
      $region14: #{feed_forward_net.3} parent=11 // pred_check_branch
        %148 = sbr.rel (%p146) target = $region16
      $region15: #{feed_forward_net.3} parent=11 // pred_region
        _
      $region16: #{feed_forward_net.3} parent=11 // pred_fallthru
        _
      // Predicated region
      $region17: #{feed_forward_net.3} parent=11 // pred_check
        %p149 = pneg %p79
      $region18: #{feed_forward_net.3} parent=11 // pred_check_branch
        %151 = sbr.rel (%p149) target = $region20
      $region19: #{feed_forward_net.3} parent=11 // pred_region
        _
      $region20: #{feed_forward_net.3} parent=11 // pred_fallthru
        _
    $region12: #{feed_forward_net.3} parent=5 // pred_fallthru
      _
    %p152 = scmp.lt.s32.totalorder %s11, 2
    // Predicated region
    $region21: #{feed_forward_net.3} parent=5 // pred_check
      %p153 = pneg %p152
    $region22: #{feed_forward_net.3} parent=5 // pred_check_branch
      %155 = sbr.rel (%p153) target = $region24
    $region23: #{feed_forward_net.3} parent=5 // pred_region
      // Predicated region
      $region25: #{feed_forward_net.3} parent=23 // pred_check
        %p156 = pneg %p31
      $region26: #{feed_forward_net.3} parent=23 // pred_check_branch
        %158 = sbr.rel (%p156) target = $region28
      $region27: #{feed_forward_net.3} parent=23 // pred_region
        %s159 = smul.u32 16, %s11
        %p160 = scmp.lt.s32.totalorder %s159, 31
        %s161 = scalar_select %p160, %s159, 31
        %s162 = smul.addr %s161, 4
        %s163 = scalar_lea.vmem %s0, %s162
        %s164 = smul.u32 16, %s11
      $region28: #{feed_forward_net.3} parent=23 // pred_fallthru
        _
    $region24: #{feed_forward_net.3} parent=5 // pred_fallthru
      _
    %p165 = scmp.le.s32.totalorder 1, %s11
    %p166 = scmp.lt.s32.totalorder %s11, 3
    %p167 = pnand %p165, %p166
    %p168 = pneg %p167
    // Predicated region
    $region29: #{feed_forward_net.3} parent=5 // pred_check
      _
    $region30: #{feed_forward_net.3} parent=5 // pred_check_branch
      %170 = sbr.rel (%p167) target = $region32
    $region31: #{feed_forward_net.3} parent=5 // pred_region
      %s171 = ssub.s32 %s11, 1
      %s172 = smul.u32 16, %s16
      %p173 = scmp.lt.s32.totalorder %s172, 31
      %s174 = scalar_select %p173, %s172, 31
      %s175 = smul.addr %s174, 4
      %s176 = scalar_lea.vmem %s0, %s175
      %p177 = pneg %p37
      %p178 = pneg %p34
      %p179 = pneg %p58
      %p180 = pneg %p55
      %p181 = pneg %p79
      %p182 = pneg %p76
      %p183 = pneg %p105
      %p184 = pneg %p102
      %s185 = smul.u32 16, %s16
      %p186 = scmp.lt.s32.totalorder %s185, 31
      %s187 = scalar_select %p186, %s185, 31
      %s188 = smul.addr %s187, 4
      %s189 = scalar_lea.vmem %s3, %s188
      %p190 = pneg %p131
      %p191 = pneg %p128
      %p192 = scmp.lt.s32.totalorder %s16, 1
      %s193 = scalar_select %p192, %s16, 1
      %s194 = smul.addr %s193, 2
      %s195 = scalar_lea.vmem %s4, %s194
      %s196 = smul.u32 16, %s16
      %p197 = scmp.lt.s32.totalorder %s196, 31
      %s198 = scalar_select %p197, %s196, 31
      %s199 = smul.addr %s198, 4
      %s200 = scalar_lea.vmem %s0, %s199
      %s201 = smul.u32 16, %s16
      %s202 = smul.u32 16, %s16
      %p203 = scmp.lt.s32.totalorder %s202, 31
      %s204 = scalar_select %p203, %s202, 31
      %s205 = smul.addr %s204, 4
      %s206 = scalar_lea.vmem %s3, %s205
      %s207 = smul.u32 16, %s16
      %p208 = scmp.lt.s32.totalorder %s16, 1
      %s209 = scalar_select %p208, %s16, 1
      %s210 = smul.addr %s209, 2
      %s211 = scalar_lea.vmem %s4, %s210
      %v213 = vld [vmem:[%s200] sm:$0xf]
      %v214 = vld [vmem:[%s200 + $0x4] sm:$0xf]
      %v215 = vld [vmem:[%s200 + $0x8] sm:$0xf]
      %v216 = vld [vmem:[%s200 + $0xc] sm:$0xf]
      %v217 = vld [vmem:[%s200 + $0x10] sm:$0xf]
      %v218 = vld [vmem:[%s200 + $0x14] sm:$0xf]
      %v219 = vld [vmem:[%s200 + $0x18] sm:$0xf]
      %v220 = vld [vmem:[%s200 + $0x1c] sm:$0xf]
      %v221 = vld [vmem:[%s200 + $0x20] sm:$0xf]
      %v222 = vld [vmem:[%s200 + $0x24] sm:$0xf]
      %v223 = vld [vmem:[%s200 + $0x28] sm:$0xf]
      %v224 = vld [vmem:[%s200 + $0x2c] sm:$0xf]
      %v225 = vld [vmem:[%s200 + $0x30] sm:$0xf]
      %v226 = vld [vmem:[%s200 + $0x34] sm:$0xf]
      %v227 = vld [vmem:[%s200 + $0x38] sm:$0xf]
      %v228 = vld [vmem:[%s200 + $0x3c] sm:$0xf]
      %v229 = vld [vmem:[%s1] sm:$0xf]
      %v230 = vld [vmem:[%s1 + $0x4] sm:$0xf]
      %v231 = vld [vmem:[%s2] sm:$0x1]
      %v233 = vlaneseq
      %v234 = vshrl.u32 %v233, 7
      %v235 = vsub.s32 0, %v234
      %v236 = vrot.slane %v231, %v235
      %v254 = vunpack.c.l.b16 %v213
      %v255 = vunpack.c.l.b16 %v214
      %v256 = vunpack.c.l.b16 %v215
      %v257 = vunpack.c.l.b16 %v216
      %v258 = vunpack.c.l.b16 %v217
      %v259 = vunpack.c.l.b16 %v218
      %v260 = vunpack.c.l.b16 %v219
      %v261 = vunpack.c.l.b16 %v220
      %v262 = vunpack.c.l.b16 %v221
      %v263 = vunpack.c.l.b16 %v222
      %v264 = vunpack.c.l.b16 %v223
      %v265 = vunpack.c.l.b16 %v224
      %v266 = vunpack.c.l.b16 %v225
      %v267 = vunpack.c.l.b16 %v226
      %v268 = vunpack.c.l.b16 %v227
      %v269 = vunpack.c.l.b16 %v228
      %v270 = vpack.c.b16 %v255, %v254
      %v271 = vpack.c.b16 %v257, %v256
      %v272 = vpack.c.b16 %v259, %v258
      %v273 = vpack.c.b16 %v261, %v260
      %v274 = vpack.c.b16 %v263, %v262
      %v275 = vpack.c.b16 %v265, %v264
      %v276 = vpack.c.b16 %v267, %v266
      %v277 = vpack.c.b16 %v269, %v268
      %v280 = vunpack.c.l.b16 %v229
      %v281 = vunpack.c.l.b16 %v230
      %v282 = vpack.c.b16 %v281, %v280
      %vm284 = vcmask 130048
      %v286 = vsel %vm284, %v270, 0
      %v289 = vsel %vm284, %v271, 0
      %v292 = vsel %vm284, %v272, 0
      %v295 = vsel %vm284, %v273, 0
      %v298 = vsel %vm284, %v274, 0
      %v301 = vsel %vm284, %v275, 0
      %v304 = vsel %vm284, %v276, 0
      %v307 = vsel %vm284, %v277, 0
      %309 = vmatprep.subr.bf16.mxu0 0
      %310 = vmatpush1.bf16.msra.mxu0 0
      %311 = vmatprep.subr.bf16.mxu0 0
      %312 = vmatpush1.bf16.msra.mxu0 0
      %313 = vmatprep.subr.bf16.mxu0 0
      %314 = vmatpush1.bf16.msra.mxu0 0
      %315 = vmatprep.subr.bf16.mxu0 0
      %316 = vmatpush1.bf16.msra.mxu0 0
      %317 = vmatprep.subr.bf16.mxu0 0
      %318 = vmatpush1.bf16.msra.mxu0 0
      %319 = vmatprep.subr.bf16.mxu0 0
      %320 = vmatpush1.bf16.msra.mxu0 0
      %321 = vmatprep.subr.bf16.mxu0 0
      %322 = vmatpush1.bf16.msra.mxu0 0
      %323 = vmatprep.subr.bf16.mxu0 0
      %324 = vmatpush1.bf16.msra.mxu0 %v282
      %325 = vmatprep.subr.bf16.mxu0 0
      %326 = vmatpush2.bf16.msra.mxu0 0
      %327 = vmatprep.subr.bf16.mxu0 0
      %328 = vmatpush2.bf16.msra.mxu0 0
      %329 = vmatprep.subr.bf16.mxu0 0
      %330 = vmatpush2.bf16.msra.mxu0 0
      %331 = vmatprep.subr.bf16.mxu0 0
      %332 = vmatpush2.bf16.msra.mxu0 0
      %333 = vmatprep.subr.bf16.mxu0 0
      %334 = vmatpush2.bf16.msra.mxu0 0
      %335 = vmatprep.subr.bf16.mxu0 0
      %336 = vmatpush2.bf16.msra.mxu0 0
      %337 = vmatprep.subr.bf16.mxu0 0
      %338 = vmatpush2.bf16.msra.mxu0 0
      %339 = vmatprep.subr.bf16.mxu0 0
      %340 = vmatpush2.bf16.msra.mxu0 0
      %341 = vmatprep.mubr.bf16.mxu0 0
      %342 = vmatmul.mubr.bf16.gmra.mxu0 %v286
      %v343 = vpop.f32.mrf.mxu0
      %v344 = vadd.f32 %v236, %v343
      %v345 = vpop.f32.mrf.mxu0
      %v346 = vpop.f32.mrf.mxu0
      %v347 = vadd.f32 %v236, %v346
      %v348 = vpop.f32.mrf.mxu0
      %349 = vmatprep.mubr.bf16.mxu0 0
      %350 = vmatmul.mubr.bf16.gmra.mxu0 %v289
      %v351 = vpop.f32.mrf.mxu0
      %v352 = vadd.f32 %v236, %v351
      %v353 = vpop.f32.mrf.mxu0
      %v354 = vpop.f32.mrf.mxu0
      %v355 = vadd.f32 %v236, %v354
      %v356 = vpop.f32.mrf.mxu0
      %357 = vmatprep.mubr.bf16.mxu0 0
      %358 = vmatmul.mubr.bf16.gmra.mxu0 %v292
      %v359 = vpop.f32.mrf.mxu0
      %v360 = vadd.f32 %v236, %v359
      %v361 = vpop.f32.mrf.mxu0
      %v362 = vpop.f32.mrf.mxu0
      %v363 = vadd.f32 %v236, %v362
      %v364 = vpop.f32.mrf.mxu0
      %365 = vmatprep.mubr.bf16.mxu0 0
      %366 = vmatmul.mubr.bf16.gmra.mxu0 %v295
      %v367 = vpop.f32.mrf.mxu0
      %v368 = vadd.f32 %v236, %v367
      %v369 = vpop.f32.mrf.mxu0
      %v370 = vpop.f32.mrf.mxu0
      %v371 = vadd.f32 %v236, %v370
      %v372 = vpop.f32.mrf.mxu0
      %373 = vmatprep.mubr.bf16.mxu0 0
      %374 = vmatmul.mubr.bf16.gmra.mxu0 %v298
      %v375 = vpop.f32.mrf.mxu0
      %v376 = vadd.f32 %v236, %v375
      %v377 = vpop.f32.mrf.mxu0
      %v378 = vpop.f32.mrf.mxu0
      %v379 = vadd.f32 %v236, %v378
      %v380 = vpop.f32.mrf.mxu0
      %381 = vmatprep.mubr.bf16.mxu0 0
      %382 = vmatmul.mubr.bf16.gmra.mxu0 %v301
      %v383 = vpop.f32.mrf.mxu0
      %v384 = vadd.f32 %v236, %v383
      %v385 = vpop.f32.mrf.mxu0
      %v386 = vpop.f32.mrf.mxu0
      %v387 = vadd.f32 %v236, %v386
      %v388 = vpop.f32.mrf.mxu0
      %389 = vmatprep.mubr.bf16.mxu0 0
      %390 = vmatmul.mubr.bf16.gmra.mxu0 %v304
      %v391 = vpop.f32.mrf.mxu0
      %v392 = vadd.f32 %v236, %v391
      %v393 = vpop.f32.mrf.mxu0
      %v394 = vpop.f32.mrf.mxu0
      %v395 = vadd.f32 %v236, %v394
      %v396 = vpop.f32.mrf.mxu0
      %397 = vmatprep.mubr.bf16.mxu0 0
      %398 = vmatmul.mubr.bf16.gmra.mxu0 %v307
      %v399 = vpop.f32.mrf.mxu0
      %v400 = vadd.f32 %v236, %v399
      %v401 = vpop.f32.mrf.mxu0
      %v402 = vpop.f32.mrf.mxu0
      %v403 = vadd.f32 %v236, %v402
      %v404 = vpop.f32.mrf.mxu0
      %405 = vdwg.mxu0
      %vm406 = vcmp.gt.f32.partialorder %v344, 0.0
      %vm407 = vcmp.gt.f32.partialorder %v347, 0.0
      %vm408 = vcmp.gt.f32.partialorder %v352, 0.0
      %vm409 = vcmp.gt.f32.partialorder %v355, 0.0
      %vm410 = vcmp.gt.f32.partialorder %v360, 0.0
      %vm411 = vcmp.gt.f32.partialorder %v363, 0.0
      %vm412 = vcmp.gt.f32.partialorder %v368, 0.0
      %vm413 = vcmp.gt.f32.partialorder %v371, 0.0
      %vm414 = vcmp.gt.f32.partialorder %v376, 0.0
      %vm415 = vcmp.gt.f32.partialorder %v379, 0.0
      %vm416 = vcmp.gt.f32.partialorder %v384, 0.0
      %vm417 = vcmp.gt.f32.partialorder %v387, 0.0
      %vm418 = vcmp.gt.f32.partialorder %v392, 0.0
      %vm419 = vcmp.gt.f32.partialorder %v395, 0.0
      %vm420 = vcmp.gt.f32.partialorder %v400, 0.0
      %vm421 = vcmp.gt.f32.partialorder %v403, 0.0
      %v422 = vmul.f32 %v344, 0.01
      %v423 = vmul.f32 %v347, 0.01
      %v424 = vmul.f32 %v352, 0.01
      %v425 = vmul.f32 %v355, 0.01
      %v426 = vmul.f32 %v360, 0.01
      %v427 = vmul.f32 %v363, 0.01
      %v428 = vmul.f32 %v368, 0.01
      %v429 = vmul.f32 %v371, 0.01
      %v430 = vmul.f32 %v376, 0.01
      %v431 = vmul.f32 %v379, 0.01
      %v432 = vmul.f32 %v384, 0.01
      %v433 = vmul.f32 %v387, 0.01
      %v434 = vmul.f32 %v392, 0.01
      %v435 = vmul.f32 %v395, 0.01
      %v436 = vmul.f32 %v400, 0.01
      %v437 = vmul.f32 %v403, 0.01
      %v438 = vsel %vm406, %v344, %v422
      %v439 = vsel %vm407, %v347, %v423
      %v440 = vsel %vm408, %v352, %v424
      %v441 = vsel %vm409, %v355, %v425
      %v442 = vsel %vm410, %v360, %v426
      %v443 = vsel %vm411, %v363, %v427
      %v444 = vsel %vm412, %v368, %v428
      %v445 = vsel %vm413, %v371, %v429
      %v446 = vsel %vm414, %v376, %v430
      %v447 = vsel %vm415, %v379, %v431
      %v448 = vsel %vm416, %v384, %v432
      %v449 = vsel %vm417, %v387, %v433
      %v450 = vsel %vm418, %v392, %v434
      %v451 = vsel %vm419, %v395, %v435
      %v452 = vsel %vm420, %v400, %v436
      %v453 = vsel %vm421, %v403, %v437
      %v454 = vpack.c.bf16 %v439, %v438
      %v455 = vpack.c.bf16 %v441, %v440
      %v456 = vpack.c.bf16 %v443, %v442
      %v457 = vpack.c.bf16 %v445, %v444
      %v458 = vpack.c.bf16 %v447, %v446
      %v459 = vpack.c.bf16 %v449, %v448
      %v460 = vpack.c.bf16 %v451, %v450
      %v461 = vpack.c.bf16 %v453, %v452
      %v470 = vunpack.c.l.b16 %v454
      %v471 = vunpack.c.h.b16 %v454
      %v472 = vunpack.c.l.b16 %v455
      %v473 = vunpack.c.h.b16 %v455
      %v474 = vunpack.c.l.b16 %v456
      %v475 = vunpack.c.h.b16 %v456
      %v476 = vunpack.c.l.b16 %v457
      %v477 = vunpack.c.h.b16 %v457
      %v478 = vunpack.c.l.b16 %v458
      %v479 = vunpack.c.h.b16 %v458
      %v480 = vunpack.c.l.b16 %v459
      %v481 = vunpack.c.h.b16 %v459
      %v482 = vunpack.c.l.b16 %v460
      %v483 = vunpack.c.h.b16 %v460
      %v484 = vunpack.c.l.b16 %v461
      %v485 = vunpack.c.h.b16 %v461
      %v486 = vpack.c.b16 %v470, %v470
      %v487 = vpack.c.b16 %v471, %v471
      %v488 = vpack.c.b16 %v472, %v472
      %v489 = vpack.c.b16 %v473, %v473
      %v490 = vpack.c.b16 %v474, %v474
      %v491 = vpack.c.b16 %v475, %v475
      %v492 = vpack.c.b16 %v476, %v476
      %v493 = vpack.c.b16 %v477, %v477
      %v494 = vpack.c.b16 %v478, %v478
      %v495 = vpack.c.b16 %v479, %v479
      %v496 = vpack.c.b16 %v480, %v480
      %v497 = vpack.c.b16 %v481, %v481
      %v498 = vpack.c.b16 %v482, %v482
      %v499 = vpack.c.b16 %v483, %v483
      %v500 = vpack.c.b16 %v484, %v484
      %v501 = vpack.c.b16 %v485, %v485
      %518 = vst [vmem:[%s206] sm:$0xf] %v486
      %519 = vst [vmem:[%s206 + $0x4] sm:$0xf] %v487
      %520 = vst [vmem:[%s206 + $0x8] sm:$0xf] %v488
      %521 = vst [vmem:[%s206 + $0xc] sm:$0xf] %v489
      %522 = vst [vmem:[%s206 + $0x10] sm:$0xf] %v490
      %523 = vst [vmem:[%s206 + $0x14] sm:$0xf] %v491
      %524 = vst [vmem:[%s206 + $0x18] sm:$0xf] %v492
      %525 = vst [vmem:[%s206 + $0x1c] sm:$0xf] %v493
      %526 = vst [vmem:[%s206 + $0x20] sm:$0xf] %v494
      %527 = vst [vmem:[%s206 + $0x24] sm:$0xf] %v495
      %528 = vst [vmem:[%s206 + $0x28] sm:$0xf] %v496
      %529 = vst [vmem:[%s206 + $0x2c] sm:$0xf] %v497
      %530 = vst [vmem:[%s206 + $0x30] sm:$0xf] %v498
      %531 = vst [vmem:[%s206 + $0x34] sm:$0xf] %v499
      %532 = vst [vmem:[%s206 + $0x38] sm:$0xf] %v500
      %533 = vst [vmem:[%s206 + $0x3c] sm:$0xf] %v501
      %v534 = vlaneseq
      %v535 = vshrl.u32 %v534, 7
      %v536 = vadd.s32 %v535, 8
      %v537 = vadd.s32 %v535, 16
      %v538 = vadd.s32 %v535, 24
      %v539 = vadd.s32 %v535, 32
      %v540 = vadd.s32 %v535, 40
      %v541 = vadd.s32 %v535, 48
      %v542 = vadd.s32 %v535, 56
      %v543 = vadd.s32 %v535, 64
      %v544 = vadd.s32 %v535, 72
      %v545 = vadd.s32 %v535, 80
      %v546 = vadd.s32 %v535, 88
      %v547 = vadd.s32 %v535, 96
      %v548 = vadd.s32 %v535, 104
      %v549 = vadd.s32 %v535, 112
      %v550 = vadd.s32 %v535, 120
      %s551 = smul.u32 %s16, 128
      %v552 = vstv %s551
      %v553 = vadd.s32 %v535, %v552
      %v554 = vadd.s32 %v536, %v552
      %v555 = vadd.s32 %v537, %v552
      %v556 = vadd.s32 %v538, %v552
      %v557 = vadd.s32 %v539, %v552
      %v558 = vadd.s32 %v540, %v552
      %v559 = vadd.s32 %v541, %v552
      %v560 = vadd.s32 %v542, %v552
      %v561 = vadd.s32 %v543, %v552
      %v562 = vadd.s32 %v544, %v552
      %v563 = vadd.s32 %v545, %v552
      %v564 = vadd.s32 %v546, %v552
      %v565 = vadd.s32 %v547, %v552
      %v566 = vadd.s32 %v548, %v552
      %v567 = vadd.s32 %v549, %v552
      %v568 = vadd.s32 %v550, %v552
      %vm569 = vcmp.lt.s32.totalorder %v553, 200
      %vm570 = vcmp.lt.s32.totalorder %v554, 200
      %vm571 = vcmp.lt.s32.totalorder %v555, 200
      %vm572 = vcmp.lt.s32.totalorder %v556, 200
      %vm573 = vcmp.lt.s32.totalorder %v557, 200
      %vm574 = vcmp.lt.s32.totalorder %v558, 200
      %vm575 = vcmp.lt.s32.totalorder %v559, 200
      %vm576 = vcmp.lt.s32.totalorder %v560, 200
      %vm577 = vcmp.lt.s32.totalorder %v561, 200
      %vm578 = vcmp.lt.s32.totalorder %v562, 200
      %vm579 = vcmp.lt.s32.totalorder %v563, 200
      %vm580 = vcmp.lt.s32.totalorder %v564, 200
      %vm581 = vcmp.lt.s32.totalorder %v565, 200
      %vm582 = vcmp.lt.s32.totalorder %v566, 200
      %vm583 = vcmp.lt.s32.totalorder %v567, 200
      %vm584 = vcmp.lt.s32.totalorder %v568, 200
      %v585 = vsel %vm569, %v438, 0.0
      %v586 = vsel %vm570, %v439, 0.0
      %v587 = vsel %vm571, %v440, 0.0
      %v588 = vsel %vm572, %v441, 0.0
      %v589 = vsel %vm573, %v442, 0.0
      %v590 = vsel %vm574, %v443, 0.0
      %v591 = vsel %vm575, %v444, 0.0
      %v592 = vsel %vm576, %v445, 0.0
      %v593 = vsel %vm577, %v446, 0.0
      %v594 = vsel %vm578, %v447, 0.0
      %v595 = vsel %vm579, %v448, 0.0
      %v596 = vsel %vm580, %v449, 0.0
      %v597 = vsel %vm581, %v450, 0.0
      %v598 = vsel %vm582, %v451, 0.0
      %v599 = vsel %vm583, %v452, 0.0
      %v600 = vsel %vm584, %v453, 0.0
      %v601 = vadd.f32 %v585, %v586
      %v602 = vadd.f32 %v601, %v587
      %v603 = vadd.f32 %v602, %v588
      %v604 = vadd.f32 %v603, %v589
      %v605 = vadd.f32 %v604, %v590
      %v606 = vadd.f32 %v605, %v591
      %v607 = vadd.f32 %v606, %v592
      %v608 = vadd.f32 %v607, %v593
      %v609 = vadd.f32 %v608, %v594
      %v610 = vadd.f32 %v609, %v595
      %v611 = vadd.f32 %v610, %v596
      %v612 = vadd.f32 %v611, %v597
      %v613 = vadd.f32 %v612, %v598
      %v614 = vadd.f32 %v613, %v599
      %v615 = vadd.f32 %v614, %v600
      %v616 = vrot.slane %v615, 4
      %v617 = vadd.f32 %v615, %v616
      %v618 = vrot.slane %v617, 2
      %v619 = vadd.f32 %v617, %v618
      %v620 = vrot.slane %v619, 1
      %v621 = vadd.f32 %v619, %v620
      %622 = vst [vmem:[%s211] sm:$0x1] %v621
      %v623 = vmul.f32 %v585, %v585
      %v624 = vmul.f32 %v586, %v586
      %v625 = vmul.f32 %v587, %v587
      %v626 = vmul.f32 %v588, %v588
      %v627 = vmul.f32 %v589, %v589
      %v628 = vmul.f32 %v590, %v590
      %v629 = vmul.f32 %v591, %v591
      %v630 = vmul.f32 %v592, %v592
      %v631 = vmul.f32 %v593, %v593
      %v632 = vmul.f32 %v594, %v594
      %v633 = vmul.f32 %v595, %v595
      %v634 = vmul.f32 %v596, %v596
      %v635 = vmul.f32 %v597, %v597
      %v636 = vmul.f32 %v598, %v598
      %v637 = vmul.f32 %v599, %v599
      %v638 = vmul.f32 %v600, %v600
      %v639 = vadd.f32 %v623, %v624
      %v640 = vadd.f32 %v639, %v625
      %v641 = vadd.f32 %v640, %v626
      %v642 = vadd.f32 %v641, %v627
      %v643 = vadd.f32 %v642, %v628
      %v644 = vadd.f32 %v643, %v629
      %v645 = vadd.f32 %v644, %v630
      %v646 = vadd.f32 %v645, %v631
      %v647 = vadd.f32 %v646, %v632
      %v648 = vadd.f32 %v647, %v633
      %v649 = vadd.f32 %v648, %v634
      %v650 = vadd.f32 %v649, %v635
      %v651 = vadd.f32 %v650, %v636
      %v652 = vadd.f32 %v651, %v637
      %v653 = vadd.f32 %v652, %v638
      %v654 = vrot.slane %v653, 4
      %v655 = vadd.f32 %v653, %v654
      %v656 = vrot.slane %v655, 2
      %v657 = vadd.f32 %v655, %v656
      %v658 = vrot.slane %v657, 1
      %v659 = vadd.f32 %v657, %v658
      %660 = vst [vmem:[%s211 + $0x1] sm:$0x1] %v659
      %s661 = smul.u32 16, %s16
      %p662 = scmp.lt.s32.totalorder %s661, 31
      %s663 = scalar_select %p662, %s661, 31
      %s664 = smul.addr %s663, 4
      %s665 = scalar_lea.vmem %s3, %s664
      %p666 = scmp.lt.s32.totalorder %s16, 1
      %s667 = scalar_select %p666, %s16, 1
      %s668 = smul.addr %s667, 2
      %s669 = scalar_lea.vmem %s4, %s668
      // Predicated region
      $region33: #{feed_forward_net.3} parent=31 // pred_check
        %p670 = pneg %p102
      $region34: #{feed_forward_net.3} parent=31 // pred_check_branch
        %672 = sbr.rel (%p670) target = $region36
      $region35: #{feed_forward_net.3} parent=31 // pred_region
        %s673 = smul.u32 16, %s16
      $region36: #{feed_forward_net.3} parent=31 // pred_fallthru
        _
      // Predicated region
      $region37: #{feed_forward_net.3} parent=31 // pred_check
        %p674 = pneg %p128
      $region38: #{feed_forward_net.3} parent=31 // pred_check_branch
        %676 = sbr.rel (%p674) target = $region40
      $region39: #{feed_forward_net.3} parent=31 // pred_region
        _
      $region40: #{feed_forward_net.3} parent=31 // pred_fallthru
        _
    $region32: #{feed_forward_net.3} parent=5 // pred_fallthru
      _
    %p677 = scmp.le.s32.totalorder 2, %s11
    // Predicated region
    $region41: #{feed_forward_net.3} parent=5 // pred_check
      %p678 = pneg %p677
    $region42: #{feed_forward_net.3} parent=5 // pred_check_branch
      %680 = sbr.rel (%p678) target = $region44
    $region43: #{feed_forward_net.3} parent=5 // pred_region
      %s681 = ssub.s32 %s11, 2
      // Predicated region
      $region45: #{feed_forward_net.3} parent=43 // pred_check
        %p682 = pneg %p108
      $region46: #{feed_forward_net.3} parent=43 // pred_check_branch
        %684 = sbr.rel (%p682) target = $region48
      $region47: #{feed_forward_net.3} parent=43 // pred_region
        %s685 = smul.u32 16, %s17
        %p686 = scmp.lt.s32.totalorder %s685, 31
        %s687 = scalar_select %p686, %s685, 31
        %s688 = smul.addr %s687, 4
        %s689 = scalar_lea.vmem %s3, %s688
      $region48: #{feed_forward_net.3} parent=43 // pred_fallthru
        _
      // Predicated region
      $region49: #{feed_forward_net.3} parent=43 // pred_check
        %p690 = pneg %p134
      $region50: #{feed_forward_net.3} parent=43 // pred_check_branch
        %692 = sbr.rel (%p690) target = $region52
      $region51: #{feed_forward_net.3} parent=43 // pred_region
        %p693 = scmp.lt.s32.totalorder %s17, 1
        %s694 = scalar_select %p693, %s17, 1
        %s695 = smul.addr %s694, 2
        %s696 = scalar_lea.vmem %s4, %s695
      $region52: #{feed_forward_net.3} parent=43 // pred_fallthru
        _
    $region44: #{feed_forward_net.3} parent=5 // pred_fallthru
      _
  $region6: #{feed_forward_net.3} parent=0 // loop_footer
    %s15 = sadd.s32 1, %s11
  $region7: #{feed_forward_net.3} parent=0 // loop_footer_branch
    %10 = sbr.rel target = $region3
  $region8: #{feed_forward_net.3} parent=0 // loop_exit
    _

// kernel: feed_forward_net.4
$region0: #{feed_forward_net.4}
  #allocation0 [shape = 'u32[]', space=smem, size = 0x4, offset = 0x4, fixed_abs, tag = 'smem constant byte address 0x4 - core index']
  #allocation1 [shape = 'u32[144,128]{1,0:T(1,128)}', space=vmem, size = 0x12000, scoped, tag = 'internal scratch']
  %s0 = inlined_call_operand.vmem [shape: bf16[256,128], index: 0, kind: input, shape index: {}]
  %s1 = inlined_call_operand.vmem [shape: bf16[128,128], index: 1, kind: input, shape index: {}]
  %s2 = inlined_call_operand.vmem [shape: f32[1,128], index: 2, kind: input, shape index: {}]
  %s3 = inlined_call_operand.vmem [shape: bf16[256,128], index: 3, kind: output, shape index: {0}]
  %s4 = inlined_call_operand.vmem [shape: f32[2,2,128], index: 4, kind: output, shape index: {1}]
  %5 = xla_tuple %s3, %s4
  %s6 = sld [smem:[#allocation0]]
  $region53: #{feed_forward_net.4} parent=0
    _
  %s8 = ssub.s32 1, %s6
  %s9 = scalar_select 0, %s8, %s6
  loop: start=0, step=1, limit=4
  $region2: #{feed_forward_net.4} parent=0 // loop_pre_header
    _
  $region3: #{feed_forward_net.4} parent=0 // loop_header
    %s11 = sphi 0, %s15
    %p12 = scmp.ge.s32.totalorder %s11, 4
    %s21 = sphi 0, %s23
    %s24 = sphi 0, %s21
    %s25 = sphi 0, %s24
    %s41 = sphi 0, %s25
    %s45 = sphi 0, %s45
    %s47 = sphi 0, %s45
    %s48 = sphi 0, %s47
    %s62 = sphi 0, %s48
    %s66 = sphi 0, %s66
    %s68 = sphi 0, %s66
    %s69 = sphi 0, %s68
    %s83 = sphi 0, %s69
    %s89 = sphi 0, %s91
    %s92 = sphi 0, %s89
    %s93 = sphi 0, %s92
    %s109 = sphi 0, %s93
    %s115 = sphi 0, %s117
    %s118 = sphi 0, %s115
    %s119 = sphi 0, %s118
    %s135 = sphi 0, %s119
  $region4: #{feed_forward_net.4} parent=0 // loop_header_branch
    %14 = sbr.rel (%p12) target = $region8
  $region5: #{feed_forward_net.4} parent=0 // loop_body
    %s16 = ssub.s32 %s11, 1
    %s17 = ssub.s32 %s11, 2
    %s18 = sadd.s32 %s11, 1
    %s19 = ssub.s32 %s11, %s18
    %p20 = scmp.eq.s32.totalorder %s19, 0
    %s22 = sadd.s32 %s21, 1
    %s23 = scalar_select %p20, %s21, %s22
    %p26 = pneg %p20
    %p27 = scmp.eq.s32.totalorder %s11, 1
    %p28 = por %p26, %p27
    %p29 = scmp.ne.s32.totalorder %s21, %s24
    %p30 = scmp.eq.s32.totalorder %s11, 0
    %p31 = por %p29, %p30
    %p32 = scmp.ne.s32.totalorder %s21, %s24
    %p33 = scmp.eq.s32.totalorder %s16, 1
    %p34 = por %p32, %p33
    %p35 = scmp.ne.s32.totalorder %s24, %s25
    %p36 = scmp.eq.s32.totalorder %s16, 0
    %p37 = por %p35, %p36
    %p38 = scmp.ne.s32.totalorder %s24, %s25
    %p39 = scmp.eq.s32.totalorder %s17, 1
    %p40 = por %p38, %p39
    %p42 = scmp.ne.s32.totalorder %s25, %s41
    %p43 = scmp.eq.s32.totalorder %s17, 0
    %p44 = por %p42, %p43
    %s46 = sadd.s32 %s45, 1
    %p49 = scmp.eq.s32.totalorder %s11, 1
    %p50 = scmp.ne.s32.totalorder %s45, %s47
    %p51 = scmp.eq.s32.totalorder %s11, 0
    %p52 = por %p50, %p51
    %p53 = scmp.ne.s32.totalorder %s45, %s47
    %p54 = scmp.eq.s32.totalorder %s16, 1
    %p55 = por %p53, %p54
    %p56 = scmp.ne.s32.totalorder %s47, %s48
    %p57 = scmp.eq.s32.totalorder %s16, 0
    %p58 = por %p56, %p57
    %p59 = scmp.ne.s32.totalorder %s47, %s48
    %p60 = scmp.eq.s32.totalorder %s17, 1
    %p61 = por %p59, %p60
    %p63 = scmp.ne.s32.totalorder %s48, %s62
    %p64 = scmp.eq.s32.totalorder %s17, 0
    %p65 = por %p63, %p64
    %s67 = sadd.s32 %s66, 1
    %p70 = scmp.eq.s32.totalorder %s11, 1
    %p71 = scmp.ne.s32.totalorder %s66, %s68
    %p72 = scmp.eq.s32.totalorder %s11, 0
    %p73 = por %p71, %p72
    %p74 = scmp.ne.s32.totalorder %s66, %s68
    %p75 = scmp.eq.s32.totalorder %s16, 1
    %p76 = por %p74, %p75
    %p77 = scmp.ne.s32.totalorder %s68, %s69
    %p78 = scmp.eq.s32.totalorder %s16, 0
    %p79 = por %p77, %p78
    %p80 = scmp.ne.s32.totalorder %s68, %s69
    %p81 = scmp.eq.s32.totalorder %s17, 1
    %p82 = por %p80, %p81
    %p84 = scmp.ne.s32.totalorder %s69, %s83
    %p85 = scmp.eq.s32.totalorder %s17, 0
    %p86 = por %p84, %p85
    %s87 = ssub.s32 %s11, %s18
    %p88 = scmp.eq.s32.totalorder %s87, 0
    %s90 = sadd.s32 %s89, 1
    %s91 = scalar_select %p88, %s89, %s90
    %p94 = pneg %p88
    %p95 = scmp.eq.s32.totalorder %s11, 1
    %p96 = por %p94, %p95
    %p97 = scmp.ne.s32.totalorder %s89, %s92
    %p98 = scmp.eq.s32.totalorder %s11, 0
    %p99 = por %p97, %p98
    %p100 = scmp.ne.s32.totalorder %s89, %s92
    %p101 = scmp.eq.s32.totalorder %s16, 1
    %p102 = por %p100, %p101
    %p103 = scmp.ne.s32.totalorder %s92, %s93
    %p104 = scmp.eq.s32.totalorder %s16, 0
    %p105 = por %p103, %p104
    %p106 = scmp.ne.s32.totalorder %s92, %s93
    %p107 = scmp.eq.s32.totalorder %s17, 1
    %p108 = por %p106, %p107
    %p110 = scmp.ne.s32.totalorder %s93, %s109
    %p111 = scmp.eq.s32.totalorder %s17, 0
    %p112 = por %p110, %p111
    %s113 = ssub.s32 %s11, %s18
    %p114 = scmp.eq.s32.totalorder %s113, 0
    %s116 = sadd.s32 %s115, 1
    %s117 = scalar_select %p114, %s115, %s116
    %p120 = pneg %p114
    %p121 = scmp.eq.s32.totalorder %s11, 1
    %p122 = por %p120, %p121
    %p123 = scmp.ne.s32.totalorder %s115, %s118
    %p124 = scmp.eq.s32.totalorder %s11, 0
    %p125 = por %p123, %p124
    %p126 = scmp.ne.s32.totalorder %s115, %s118
    %p127 = scmp.eq.s32.totalorder %s16, 1
    %p128 = por %p126, %p127
    %p129 = scmp.ne.s32.totalorder %s118, %s119
    %p130 = scmp.eq.s32.totalorder %s16, 0
    %p131 = por %p129, %p130
    %p132 = scmp.ne.s32.totalorder %s118, %s119
    %p133 = scmp.eq.s32.totalorder %s17, 1
    %p134 = por %p132, %p133
    %p136 = scmp.ne.s32.totalorder %s119, %s135
    %p137 = scmp.eq.s32.totalorder %s17, 0
    %p138 = por %p136, %p137
    %p139 = scmp.le.s32.totalorder 1, %s11
    %p140 = scmp.lt.s32.totalorder %s11, 3
    %p141 = pnand %p139, %p140
    %p142 = pneg %p141
    // Predicated region
    $region9: #{feed_forward_net.4} parent=5 // pred_check
      _
    $region10: #{feed_forward_net.4} parent=5 // pred_check_branch
      %144 = sbr.rel (%p141) target = $region12
    $region11: #{feed_forward_net.4} parent=5 // pred_region
      %s145 = ssub.s32 %s11, 1
      // Predicated region
      $region13: #{feed_forward_net.4} parent=11 // pred_check
        %p146 = pneg %p58
      $region14: #{feed_forward_net.4} parent=11 // pred_check_branch
        %148 = sbr.rel (%p146) target = $region16
      $region15: #{feed_forward_net.4} parent=11 // pred_region
        _
      $region16: #{feed_forward_net.4} parent=11 // pred_fallthru
        _
      // Predicated region
      $region17: #{feed_forward_net.4} parent=11 // pred_check
        %p149 = pneg %p79
      $region18: #{feed_forward_net.4} parent=11 // pred_check_branch
        %151 = sbr.rel (%p149) target = $region20
      $region19: #{feed_forward_net.4} parent=11 // pred_region
        _
      $region20: #{feed_forward_net.4} parent=11 // pred_fallthru
        _
    $region12: #{feed_forward_net.4} parent=5 // pred_fallthru
      _
    %p152 = scmp.lt.s32.totalorder %s11, 2
    // Predicated region
    $region21: #{feed_forward_net.4} parent=5 // pred_check
      %p153 = pneg %p152
    $region22: #{feed_forward_net.4} parent=5 // pred_check_branch
      %155 = sbr.rel (%p153) target = $region24
    $region23: #{feed_forward_net.4} parent=5 // pred_region
      // Predicated region
      $region25: #{feed_forward_net.4} parent=23 // pred_check
        %p156 = pneg %p31
      $region26: #{feed_forward_net.4} parent=23 // pred_check_branch
        %158 = sbr.rel (%p156) target = $region28
      $region27: #{feed_forward_net.4} parent=23 // pred_region
        %s159 = smul.u32 16, %s11
        %p160 = scmp.lt.s32.totalorder %s159, 31
        %s161 = scalar_select %p160, %s159, 31
        %s162 = smul.addr %s161, 4
        %s163 = scalar_lea.vmem %s0, %s162
        %s164 = smul.u32 16, %s11
      $region28: #{feed_forward_net.4} parent=23 // pred_fallthru
        _
    $region24: #{feed_forward_net.4} parent=5 // pred_fallthru
      _
    %p165 = scmp.le.s32.totalorder 1, %s11
    %p166 = scmp.lt.s32.totalorder %s11, 3
    %p167 = pnand %p165, %p166
    %p168 = pneg %p167
    // Predicated region
    $region29: #{feed_forward_net.4} parent=5 // pred_check
      _
    $region30: #{feed_forward_net.4} parent=5 // pred_check_branch
      %170 = sbr.rel (%p167) target = $region32
    $region31: #{feed_forward_net.4} parent=5 // pred_region
      %s171 = ssub.s32 %s11, 1
      %s172 = smul.u32 16, %s16
      %p173 = scmp.lt.s32.totalorder %s172, 31
      %s174 = scalar_select %p173, %s172, 31
      %s175 = smul.addr %s174, 4
      %s176 = scalar_lea.vmem %s0, %s175
      %p177 = pneg %p37
      %p178 = pneg %p34
      %p179 = pneg %p58
      %p180 = pneg %p55
      %p181 = pneg %p79
      %p182 = pneg %p76
      %p183 = pneg %p105
      %p184 = pneg %p102
      %s185 = smul.u32 16, %s16
      %p186 = scmp.lt.s32.totalorder %s185, 31
      %s187 = scalar_select %p186, %s185, 31
      %s188 = smul.addr %s187, 4
      %s189 = scalar_lea.vmem %s3, %s188
      %p190 = pneg %p131
      %p191 = pneg %p128
      %p192 = scmp.lt.s32.totalorder %s16, 1
      %s193 = scalar_select %p192, %s16, 1
      %s194 = smul.addr %s193, 2
      %s195 = scalar_lea.vmem %s4, %s194
      %s196 = smul.u32 16, %s16
      %p197 = scmp.lt.s32.totalorder %s196, 31
      %s198 = scalar_select %p197, %s196, 31
      %s199 = smul.addr %s198, 4
      %s200 = scalar_lea.vmem %s0, %s199
      %s201 = smul.u32 16, %s16
      %s202 = smul.u32 16, %s16
      %p203 = scmp.lt.s32.totalorder %s202, 31
      %s204 = scalar_select %p203, %s202, 31
      %s205 = smul.addr %s204, 4
      %s206 = scalar_lea.vmem %s3, %s205
      %s207 = smul.u32 16, %s16
      %p208 = scmp.lt.s32.totalorder %s16, 1
      %s209 = scalar_select %p208, %s16, 1
      %s210 = smul.addr %s209, 2
      %s211 = scalar_lea.vmem %s4, %s210
      %v213 = vld [vmem:[%s200] sm:$0xf]
      %v214 = vld [vmem:[%s200 + $0x4] sm:$0xf]
      %v215 = vld [vmem:[%s200 + $0x8] sm:$0xf]
      %v216 = vld [vmem:[%s200 + $0xc] sm:$0xf]
      %v217 = vld [vmem:[%s200 + $0x10] sm:$0xf]
      %v218 = vld [vmem:[%s200 + $0x14] sm:$0xf]
      %v219 = vld [vmem:[%s200 + $0x18] sm:$0xf]
      %v220 = vld [vmem:[%s200 + $0x1c] sm:$0xf]
      %v221 = vld [vmem:[%s200 + $0x20] sm:$0xf]
      %v222 = vld [vmem:[%s200 + $0x24] sm:$0xf]
      %v223 = vld [vmem:[%s200 + $0x28] sm:$0xf]
      %v224 = vld [vmem:[%s200 + $0x2c] sm:$0xf]
      %v225 = vld [vmem:[%s200 + $0x30] sm:$0xf]
      %v226 = vld [vmem:[%s200 + $0x34] sm:$0xf]
      %v227 = vld [vmem:[%s200 + $0x38] sm:$0xf]
      %v228 = vld [vmem:[%s200 + $0x3c] sm:$0xf]
      %v229 = vld [vmem:[%s1] sm:$0xf]
      %v230 = vld [vmem:[%s1 + $0x4] sm:$0xf]
      %v231 = vld [vmem:[%s1 + $0x8] sm:$0xf]
      %v232 = vld [vmem:[%s1 + $0xc] sm:$0xf]
      %v233 = vld [vmem:[%s1 + $0x10] sm:$0xf]
      %v234 = vld [vmem:[%s1 + $0x14] sm:$0xf]
      %v235 = vld [vmem:[%s1 + $0x18] sm:$0xf]
      %v236 = vld [vmem:[%s1 + $0x1c] sm:$0xf]
      %v237 = vld [vmem:[%s1 + $0x20] sm:$0xf]
      %v238 = vld [vmem:[%s1 + $0x24] sm:$0xf]
      %v239 = vld [vmem:[%s1 + $0x28] sm:$0xf]
      %v240 = vld [vmem:[%s1 + $0x2c] sm:$0xf]
      %v241 = vld [vmem:[%s1 + $0x30] sm:$0xf]
      %v242 = vld [vmem:[%s1 + $0x34] sm:$0xf]
      %v243 = vld [vmem:[%s1 + $0x38] sm:$0xf]
      %v244 = vld [vmem:[%s1 + $0x3c] sm:$0xf]
      %v245 = vld [vmem:[%s2] sm:$0x1]
      %v247 = vlaneseq
      %v248 = vshrl.u32 %v247, 7
      %v249 = vsub.s32 0, %v248
      %v250 = vrot.slane %v245, %v249
      %v268 = vunpack.c.l.b16 %v213
      %v269 = vunpack.c.l.b16 %v214
      %v270 = vunpack.c.l.b16 %v215
      %v271 = vunpack.c.l.b16 %v216
      %v272 = vunpack.c.l.b16 %v217
      %v273 = vunpack.c.l.b16 %v218
      %v274 = vunpack.c.l.b16 %v219
      %v275 = vunpack.c.l.b16 %v220
      %v276 = vunpack.c.l.b16 %v221
      %v277 = vunpack.c.l.b16 %v222
      %v278 = vunpack.c.l.b16 %v223
      %v279 = vunpack.c.l.b16 %v224
      %v280 = vunpack.c.l.b16 %v225
      %v281 = vunpack.c.l.b16 %v226
      %v282 = vunpack.c.l.b16 %v227
      %v283 = vunpack.c.l.b16 %v228
      %v284 = vpack.c.b16 %v269, %v268
      %v285 = vpack.c.b16 %v271, %v270
      %v286 = vpack.c.b16 %v273, %v272
      %v287 = vpack.c.b16 %v275, %v274
      %v288 = vpack.c.b16 %v277, %v276
      %v289 = vpack.c.b16 %v279, %v278
      %v290 = vpack.c.b16 %v281, %v280
      %v291 = vpack.c.b16 %v283, %v282
      %v316 = vunpack.c.l.b16 %v229
      %v317 = vunpack.c.l.b16 %v230
      %v318 = vunpack.c.l.b16 %v231
      %v319 = vunpack.c.l.b16 %v232
      %v320 = vunpack.c.l.b16 %v233
      %v321 = vunpack.c.l.b16 %v234
      %v322 = vunpack.c.l.b16 %v235
      %v323 = vunpack.c.l.b16 %v236
      %v324 = vunpack.c.l.b16 %v237
      %v325 = vunpack.c.l.b16 %v238
      %v326 = vunpack.c.l.b16 %v239
      %v327 = vunpack.c.l.b16 %v240
      %v328 = vunpack.c.l.b16 %v241
      %v329 = vunpack.c.l.b16 %v242
      %v330 = vunpack.c.l.b16 %v243
      %v331 = vunpack.c.l.b16 %v244
      %v332 = vpack.c.b16 %v317, %v316
      %v333 = vpack.c.b16 %v319, %v318
      %v334 = vpack.c.b16 %v321, %v320
      %v335 = vpack.c.b16 %v323, %v322
      %v336 = vpack.c.b16 %v325, %v324
      %v337 = vpack.c.b16 %v327, %v326
      %v338 = vpack.c.b16 %v329, %v328
      %v339 = vpack.c.b16 %v331, %v330
      %348 = vmatprep.subr.bf16.mxu0 0
      %349 = vmatpush1.bf16.msra.mxu0 %v339
      %350 = vmatprep.subr.bf16.mxu0 0
      %351 = vmatpush1.bf16.msra.mxu0 %v338
      %352 = vmatprep.subr.bf16.mxu0 0
      %353 = vmatpush1.bf16.msra.mxu0 %v337
      %354 = vmatprep.subr.bf16.mxu0 0
      %355 = vmatpush1.bf16.msra.mxu0 %v336
      %356 = vmatprep.subr.bf16.mxu0 0
      %357 = vmatpush1.bf16.msra.mxu0 %v335
      %358 = vmatprep.subr.bf16.mxu0 0
      %359 = vmatpush1.bf16.msra.mxu0 %v334
      %360 = vmatprep.subr.bf16.mxu0 0
      %361 = vmatpush1.bf16.msra.mxu0 %v333
      %362 = vmatprep.subr.bf16.mxu0 0
      %363 = vmatpush1.bf16.msra.mxu0 %v332
      %364 = vmatprep.subr.bf16.mxu0 0
      %365 = vmatpush2.bf16.msra.mxu0 0
      %366 = vmatprep.subr.bf16.mxu0 0
      %367 = vmatpush2.bf16.msra.mxu0 0
      %368 = vmatprep.subr.bf16.mxu0 0
      %369 = vmatpush2.bf16.msra.mxu0 0
      %370 = vmatprep.subr.bf16.mxu0 0
      %371 = vmatpush2.bf16.msra.mxu0 0
      %372 = vmatprep.subr.bf16.mxu0 0
      %373 = vmatpush2.bf16.msra.mxu0 0
      %374 = vmatprep.subr.bf16.mxu0 0
      %375 = vmatpush2.bf16.msra.mxu0 0
      %376 = vmatprep.subr.bf16.mxu0 0
      %377 = vmatpush2.bf16.msra.mxu0 0
      %378 = vmatprep.subr.bf16.mxu0 0
      %379 = vmatpush2.bf16.msra.mxu0 0
      %380 = vmatprep.mubr.bf16.mxu0 0
      %381 = vmatmul.mubr.bf16.gmra.mxu0 %v284
      %v382 = vpop.f32.mrf.mxu0
      %v383 = vadd.f32 %v250, %v382
      %v384 = vpop.f32.mrf.mxu0
      %v385 = vpop.f32.mrf.mxu0
      %v386 = vadd.f32 %v250, %v385
      %v387 = vpop.f32.mrf.mxu0
      %388 = vmatprep.mubr.bf16.mxu0 0
      %389 = vmatmul.mubr.bf16.gmra.mxu0 %v285
      %v390 = vpop.f32.mrf.mxu0
      %v391 = vadd.f32 %v250, %v390
      %v392 = vpop.f32.mrf.mxu0
      %v393 = vpop.f32.mrf.mxu0
      %v394 = vadd.f32 %v250, %v393
      %v395 = vpop.f32.mrf.mxu0
      %396 = vmatprep.mubr.bf16.mxu0 0
      %397 = vmatmul.mubr.bf16.gmra.mxu0 %v286
      %v398 = vpop.f32.mrf.mxu0
      %v399 = vadd.f32 %v250, %v398
      %v400 = vpop.f32.mrf.mxu0
      %v401 = vpop.f32.mrf.mxu0
      %v402 = vadd.f32 %v250, %v401
      %v403 = vpop.f32.mrf.mxu0
      %404 = vmatprep.mubr.bf16.mxu0 0
      %405 = vmatmul.mubr.bf16.gmra.mxu0 %v287
      %v406 = vpop.f32.mrf.mxu0
      %v407 = vadd.f32 %v250, %v406
      %v408 = vpop.f32.mrf.mxu0
      %v409 = vpop.f32.mrf.mxu0
      %v410 = vadd.f32 %v250, %v409
      %v411 = vpop.f32.mrf.mxu0
      %412 = vmatprep.mubr.bf16.mxu0 0
      %413 = vmatmul.mubr.bf16.gmra.mxu0 %v288
      %v414 = vpop.f32.mrf.mxu0
      %v415 = vadd.f32 %v250, %v414
      %v416 = vpop.f32.mrf.mxu0
      %v417 = vpop.f32.mrf.mxu0
      %v418 = vadd.f32 %v250, %v417
      %v419 = vpop.f32.mrf.mxu0
      %420 = vmatprep.mubr.bf16.mxu0 0
      %421 = vmatmul.mubr.bf16.gmra.mxu0 %v289
      %v422 = vpop.f32.mrf.mxu0
      %v423 = vadd.f32 %v250, %v422
      %v424 = vpop.f32.mrf.mxu0
      %v425 = vpop.f32.mrf.mxu0
      %v426 = vadd.f32 %v250, %v425
      %v427 = vpop.f32.mrf.mxu0
      %428 = vmatprep.mubr.bf16.mxu0 0
      %429 = vmatmul.mubr.bf16.gmra.mxu0 %v290
      %v430 = vpop.f32.mrf.mxu0
      %v431 = vadd.f32 %v250, %v430
      %v432 = vpop.f32.mrf.mxu0
      %v433 = vpop.f32.mrf.mxu0
      %v434 = vadd.f32 %v250, %v433
      %v435 = vpop.f32.mrf.mxu0
      %436 = vmatprep.mubr.bf16.mxu0 0
      %437 = vmatmul.mubr.bf16.gmra.mxu0 %v291
      %v438 = vpop.f32.mrf.mxu0
      %v439 = vadd.f32 %v250, %v438
      %v440 = vpop.f32.mrf.mxu0
      %v441 = vpop.f32.mrf.mxu0
      %v442 = vadd.f32 %v250, %v441
      %v443 = vpop.f32.mrf.mxu0
      %444 = vdwg.mxu0
      %vm445 = vcmp.gt.f32.partialorder %v383, 0.0
      %vm446 = vcmp.gt.f32.partialorder %v386, 0.0
      %vm447 = vcmp.gt.f32.partialorder %v391, 0.0
      %vm448 = vcmp.gt.f32.partialorder %v394, 0.0
      %vm449 = vcmp.gt.f32.partialorder %v399, 0.0
      %vm450 = vcmp.gt.f32.partialorder %v402, 0.0
      %vm451 = vcmp.gt.f32.partialorder %v407, 0.0
      %vm452 = vcmp.gt.f32.partialorder %v410, 0.0
      %vm453 = vcmp.gt.f32.partialorder %v415, 0.0
      %vm454 = vcmp.gt.f32.partialorder %v418, 0.0
      %vm455 = vcmp.gt.f32.partialorder %v423, 0.0
      %vm456 = vcmp.gt.f32.partialorder %v426, 0.0
      %vm457 = vcmp.gt.f32.partialorder %v431, 0.0
      %vm458 = vcmp.gt.f32.partialorder %v434, 0.0
      %vm459 = vcmp.gt.f32.partialorder %v439, 0.0
      %vm460 = vcmp.gt.f32.partialorder %v442, 0.0
      %v461 = vmul.f32 %v383, 0.01
      %v462 = vmul.f32 %v386, 0.01
      %v463 = vmul.f32 %v391, 0.01
      %v464 = vmul.f32 %v394, 0.01
      %v465 = vmul.f32 %v399, 0.01
      %v466 = vmul.f32 %v402, 0.01
      %v467 = vmul.f32 %v407, 0.01
      %v468 = vmul.f32 %v410, 0.01
      %v469 = vmul.f32 %v415, 0.01
      %v470 = vmul.f32 %v418, 0.01
      %v471 = vmul.f32 %v423, 0.01
      %v472 = vmul.f32 %v426, 0.01
      %v473 = vmul.f32 %v431, 0.01
      %v474 = vmul.f32 %v434, 0.01
      %v475 = vmul.f32 %v439, 0.01
      %v476 = vmul.f32 %v442, 0.01
      %v477 = vsel %vm445, %v383, %v461
      %v478 = vsel %vm446, %v386, %v462
      %v479 = vsel %vm447, %v391, %v463
      %v480 = vsel %vm448, %v394, %v464
      %v481 = vsel %vm449, %v399, %v465
      %v482 = vsel %vm450, %v402, %v466
      %v483 = vsel %vm451, %v407, %v467
      %v484 = vsel %vm452, %v410, %v468
      %v485 = vsel %vm453, %v415, %v469
      %v486 = vsel %vm454, %v418, %v470
      %v487 = vsel %vm455, %v423, %v471
      %v488 = vsel %vm456, %v426, %v472
      %v489 = vsel %vm457, %v431, %v473
      %v490 = vsel %vm458, %v434, %v474
      %v491 = vsel %vm459, %v439, %v475
      %v492 = vsel %vm460, %v442, %v476
      %v493 = vpack.c.bf16 %v478, %v477
      %v494 = vpack.c.bf16 %v480, %v479
      %v495 = vpack.c.bf16 %v482, %v481
      %v496 = vpack.c.bf16 %v484, %v483
      %v497 = vpack.c.bf16 %v486, %v485
      %v498 = vpack.c.bf16 %v488, %v487
      %v499 = vpack.c.bf16 %v490, %v489
      %v500 = vpack.c.bf16 %v492, %v491
      %v509 = vunpack.c.l.b16 %v493
      %v510 = vunpack.c.h.b16 %v493
      %v511 = vunpack.c.l.b16 %v494
      %v512 = vunpack.c.h.b16 %v494
      %v513 = vunpack.c.l.b16 %v495
      %v514 = vunpack.c.h.b16 %v495
      %v515 = vunpack.c.l.b16 %v496
      %v516 = vunpack.c.h.b16 %v496
      %v517 = vunpack.c.l.b16 %v497
      %v518 = vunpack.c.h.b16 %v497
      %v519 = vunpack.c.l.b16 %v498
      %v520 = vunpack.c.h.b16 %v498
      %v521 = vunpack.c.l.b16 %v499
      %v522 = vunpack.c.h.b16 %v499
      %v523 = vunpack.c.l.b16 %v500
      %v524 = vunpack.c.h.b16 %v500
      %v525 = vpack.c.b16 %v509, %v509
      %v526 = vpack.c.b16 %v510, %v510
      %v527 = vpack.c.b16 %v511, %v511
      %v528 = vpack.c.b16 %v512, %v512
      %v529 = vpack.c.b16 %v513, %v513
      %v530 = vpack.c.b16 %v514, %v514
      %v531 = vpack.c.b16 %v515, %v515
      %v532 = vpack.c.b16 %v516, %v516
      %v533 = vpack.c.b16 %v517, %v517
      %v534 = vpack.c.b16 %v518, %v518
      %v535 = vpack.c.b16 %v519, %v519
      %v536 = vpack.c.b16 %v520, %v520
      %v537 = vpack.c.b16 %v521, %v521
      %v538 = vpack.c.b16 %v522, %v522
      %v539 = vpack.c.b16 %v523, %v523
      %v540 = vpack.c.b16 %v524, %v524
      %557 = vst [vmem:[%s206] sm:$0xf] %v525
      %558 = vst [vmem:[%s206 + $0x4] sm:$0xf] %v526
      %559 = vst [vmem:[%s206 + $0x8] sm:$0xf] %v527
      %560 = vst [vmem:[%s206 + $0xc] sm:$0xf] %v528
      %561 = vst [vmem:[%s206 + $0x10] sm:$0xf] %v529
      %562 = vst [vmem:[%s206 + $0x14] sm:$0xf] %v530
      %563 = vst [vmem:[%s206 + $0x18] sm:$0xf] %v531
      %564 = vst [vmem:[%s206 + $0x1c] sm:$0xf] %v532
      %565 = vst [vmem:[%s206 + $0x20] sm:$0xf] %v533
      %566 = vst [vmem:[%s206 + $0x24] sm:$0xf] %v534
      %567 = vst [vmem:[%s206 + $0x28] sm:$0xf] %v535
      %568 = vst [vmem:[%s206 + $0x2c] sm:$0xf] %v536
      %569 = vst [vmem:[%s206 + $0x30] sm:$0xf] %v537
      %570 = vst [vmem:[%s206 + $0x34] sm:$0xf] %v538
      %571 = vst [vmem:[%s206 + $0x38] sm:$0xf] %v539
      %572 = vst [vmem:[%s206 + $0x3c] sm:$0xf] %v540
      %v573 = vlaneseq
      %v574 = vshrl.u32 %v573, 7
      %v575 = vadd.s32 %v574, 8
      %v576 = vadd.s32 %v574, 16
      %v577 = vadd.s32 %v574, 24
      %v578 = vadd.s32 %v574, 32
      %v579 = vadd.s32 %v574, 40
      %v580 = vadd.s32 %v574, 48
      %v581 = vadd.s32 %v574, 56
      %v582 = vadd.s32 %v574, 64
      %v583 = vadd.s32 %v574, 72
      %v584 = vadd.s32 %v574, 80
      %v585 = vadd.s32 %v574, 88
      %v586 = vadd.s32 %v574, 96
      %v587 = vadd.s32 %v574, 104
      %v588 = vadd.s32 %v574, 112
      %v589 = vadd.s32 %v574, 120
      %s590 = smul.u32 %s16, 128
      %v591 = vstv %s590
      %v592 = vadd.s32 %v574, %v591
      %v593 = vadd.s32 %v575, %v591
      %v594 = vadd.s32 %v576, %v591
      %v595 = vadd.s32 %v577, %v591
      %v596 = vadd.s32 %v578, %v591
      %v597 = vadd.s32 %v579, %v591
      %v598 = vadd.s32 %v580, %v591
      %v599 = vadd.s32 %v581, %v591
      %v600 = vadd.s32 %v582, %v591
      %v601 = vadd.s32 %v583, %v591
      %v602 = vadd.s32 %v584, %v591
      %v603 = vadd.s32 %v585, %v591
      %v604 = vadd.s32 %v586, %v591
      %v605 = vadd.s32 %v587, %v591
      %v606 = vadd.s32 %v588, %v591
      %v607 = vadd.s32 %v589, %v591
      %vm608 = vcmp.lt.s32.totalorder %v592, 200
      %vm609 = vcmp.lt.s32.totalorder %v593, 200
      %vm610 = vcmp.lt.s32.totalorder %v594, 200
      %vm611 = vcmp.lt.s32.totalorder %v595, 200
      %vm612 = vcmp.lt.s32.totalorder %v596, 200
      %vm613 = vcmp.lt.s32.totalorder %v597, 200
      %vm614 = vcmp.lt.s32.totalorder %v598, 200
      %vm615 = vcmp.lt.s32.totalorder %v599, 200
      %vm616 = vcmp.lt.s32.totalorder %v600, 200
      %vm617 = vcmp.lt.s32.totalorder %v601, 200
      %vm618 = vcmp.lt.s32.totalorder %v602, 200
      %vm619 = vcmp.lt.s32.totalorder %v603, 200
      %vm620 = vcmp.lt.s32.totalorder %v604, 200
      %vm621 = vcmp.lt.s32.totalorder %v605, 200
      %vm622 = vcmp.lt.s32.totalorder %v606, 200
      %vm623 = vcmp.lt.s32.totalorder %v607, 200
      %v624 = vsel %vm608, %v477, 0.0
      %v625 = vsel %vm609, %v478, 0.0
      %v626 = vsel %vm610, %v479, 0.0
      %v627 = vsel %vm611, %v480, 0.0
      %v628 = vsel %vm612, %v481, 0.0
      %v629 = vsel %vm613, %v482, 0.0
      %v630 = vsel %vm614, %v483, 0.0
      %v631 = vsel %vm615, %v484, 0.0
      %v632 = vsel %vm616, %v485, 0.0
      %v633 = vsel %vm617, %v486, 0.0
      %v634 = vsel %vm618, %v487, 0.0
      %v635 = vsel %vm619, %v488, 0.0
      %v636 = vsel %vm620, %v489, 0.0
      %v637 = vsel %vm621, %v490, 0.0
      %v638 = vsel %vm622, %v491, 0.0
      %v639 = vsel %vm623, %v492, 0.0
      %v640 = vadd.f32 %v624, %v625
      %v641 = vadd.f32 %v640, %v626
      %v642 = vadd.f32 %v641, %v627
      %v643 = vadd.f32 %v642, %v628
      %v644 = vadd.f32 %v643, %v629
      %v645 = vadd.f32 %v644, %v630
      %v646 = vadd.f32 %v645, %v631
      %v647 = vadd.f32 %v646, %v632
      %v648 = vadd.f32 %v647, %v633
      %v649 = vadd.f32 %v648, %v634
      %v650 = vadd.f32 %v649, %v635
      %v651 = vadd.f32 %v650, %v636
      %v652 = vadd.f32 %v651, %v637
      %v653 = vadd.f32 %v652, %v638
      %v654 = vadd.f32 %v653, %v639
      %v655 = vrot.slane %v654, 4
      %v656 = vadd.f32 %v654, %v655
      %v657 = vrot.slane %v656, 2
      %v658 = vadd.f32 %v656, %v657
      %v659 = vrot.slane %v658, 1
      %v660 = vadd.f32 %v658, %v659
      %661 = vst [vmem:[%s211] sm:$0x1] %v660
      %v662 = vmul.f32 %v624, %v624
      %v663 = vmul.f32 %v625, %v625
      %v664 = vmul.f32 %v626, %v626
      %v665 = vmul.f32 %v627, %v627
      %v666 = vmul.f32 %v628, %v628
      %v667 = vmul.f32 %v629, %v629
      %v668 = vmul.f32 %v630, %v630
      %v669 = vmul.f32 %v631, %v631
      %v670 = vmul.f32 %v632, %v632
      %v671 = vmul.f32 %v633, %v633
      %v672 = vmul.f32 %v634, %v634
      %v673 = vmul.f32 %v635, %v635
      %v674 = vmul.f32 %v636, %v636
      %v675 = vmul.f32 %v637, %v637
      %v676 = vmul.f32 %v638, %v638
      %v677 = vmul.f32 %v639, %v639
      %v678 = vadd.f32 %v662, %v663
      %v679 = vadd.f32 %v678, %v664
      %v680 = vadd.f32 %v679, %v665
      %v681 = vadd.f32 %v680, %v666
      %v682 = vadd.f32 %v681, %v667
      %v683 = vadd.f32 %v682, %v668
      %v684 = vadd.f32 %v683, %v669
      %v685 = vadd.f32 %v684, %v670
      %v686 = vadd.f32 %v685, %v671
      %v687 = vadd.f32 %v686, %v672
      %v688 = vadd.f32 %v687, %v673
      %v689 = vadd.f32 %v688, %v674
      %v690 = vadd.f32 %v689, %v675
      %v691 = vadd.f32 %v690, %v676
      %v692 = vadd.f32 %v691, %v677
      %v693 = vrot.slane %v692, 4
      %v694 = vadd.f32 %v692, %v693
      %v695 = vrot.slane %v694, 2
      %v696 = vadd.f32 %v694, %v695
      %v697 = vrot.slane %v696, 1
      %v698 = vadd.f32 %v696, %v697
      %699 = vst [vmem:[%s211 + $0x1] sm:$0x1] %v698
      %s700 = smul.u32 16, %s16
      %p701 = scmp.lt.s32.totalorder %s700, 31
      %s702 = scalar_select %p701, %s700, 31
      %s703 = smul.addr %s702, 4
      %s704 = scalar_lea.vmem %s3, %s703
      %p705 = scmp.lt.s32.totalorder %s16, 1
      %s706 = scalar_select %p705, %s16, 1
      %s707 = smul.addr %s706, 2
      %s708 = scalar_lea.vmem %s4, %s707
      // Predicated region
      $region33: #{feed_forward_net.4} parent=31 // pred_check
        %p709 = pneg %p102
      $region34: #{feed_forward_net.4} parent=31 // pred_check_branch
        %711 = sbr.rel (%p709) target = $region36
      $region35: #{feed_forward_net.4} parent=31 // pred_region
        %s712 = smul.u32 16, %s16
      $region36: #{feed_forward_net.4} parent=31 // pred_fallthru
        _
      // Predicated region
      $region37: #{feed_forward_net.4} parent=31 // pred_check
        %p713 = pneg %p128
      $region38: #{feed_forward_net.4} parent=31 // pred_check_branch
        %715 = sbr.rel (%p713) target = $region40
      $region39: #{feed_forward_net.4} parent=31 // pred_region
        _
      $region40: #{feed_forward_net.4} parent=31 // pred_fallthru
        _
    $region32: #{feed_forward_net.4} parent=5 // pred_fallthru
      _
    %p716 = scmp.le.s32.totalorder 2, %s11
    // Predicated region
    $region41: #{feed_forward_net.4} parent=5 // pred_check
      %p717 = pneg %p716
    $region42: #{feed_forward_net.4} parent=5 // pred_check_branch
      %719 = sbr.rel (%p717) target = $region44
    $region43: #{feed_forward_net.4} parent=5 // pred_region
      %s720 = ssub.s32 %s11, 2
      // Predicated region
      $region45: #{feed_forward_net.4} parent=43 // pred_check
        %p721 = pneg %p108
      $region46: #{feed_forward_net.4} parent=43 // pred_check_branch
        %723 = sbr.rel (%p721) target = $region48
      $region47: #{feed_forward_net.4} parent=43 // pred_region
        %s724 = smul.u32 16, %s17
        %p725 = scmp.lt.s32.totalorder %s724, 31
        %s726 = scalar_select %p725, %s724, 31
        %s727 = smul.addr %s726, 4
        %s728 = scalar_lea.vmem %s3, %s727
      $region48: #{feed_forward_net.4} parent=43 // pred_fallthru
        _
      // Predicated region
      $region49: #{feed_forward_net.4} parent=43 // pred_check
        %p729 = pneg %p134
      $region50: #{feed_forward_net.4} parent=43 // pred_check_branch
        %731 = sbr.rel (%p729) target = $region52
      $region51: #{feed_forward_net.4} parent=43 // pred_region
        %p732 = scmp.lt.s32.totalorder %s17, 1
        %s733 = scalar_select %p732, %s17, 1
        %s734 = smul.addr %s733, 2
        %s735 = scalar_lea.vmem %s4, %s734
      $region52: #{feed_forward_net.4} parent=43 // pred_fallthru
        _
    $region44: #{feed_forward_net.4} parent=5 // pred_fallthru
      _
  $region6: #{feed_forward_net.4} parent=0 // loop_footer
    %s15 = sadd.s32 1, %s11
  $region7: #{feed_forward_net.4} parent=0 // loop_footer_branch
    %10 = sbr.rel target = $region3
  $region8: #{feed_forward_net.4} parent=0 // loop_exit
    _

// kernel: feed_forward_net.5
$region0: #{feed_forward_net.5}
  #allocation0 [shape = 'u32[]', space=smem, size = 0x4, offset = 0x4, fixed_abs, tag = 'smem constant byte address 0x4 - core index']
  #allocation1 [shape = 'u32[144,128]{1,0:T(1,128)}', space=vmem, size = 0x12000, scoped, tag = 'internal scratch']
  %s0 = inlined_call_operand.vmem [shape: bf16[256,128], index: 0, kind: input, shape index: {}]
  %s1 = inlined_call_operand.vmem [shape: bf16[128,128], index: 1, kind: input, shape index: {}]
  %s2 = inlined_call_operand.vmem [shape: f32[1,128], index: 2, kind: input, shape index: {}]
  %s3 = inlined_call_operand.vmem [shape: f32[256,128], index: 3, kind: output, shape index: {}]
  %s4 = sld [smem:[#allocation0]]
  $region45: #{feed_forward_net.5} parent=0
    _
  %s6 = ssub.s32 1, %s4
  %s7 = scalar_select 0, %s6, %s4
  loop: start=0, step=1, limit=4
  $region2: #{feed_forward_net.5} parent=0 // loop_pre_header
    _
  $region3: #{feed_forward_net.5} parent=0 // loop_header
    %s9 = sphi 0, %s13
    %p10 = scmp.ge.s32.totalorder %s9, 4
    %s19 = sphi 0, %s21
    %s22 = sphi 0, %s19
    %s23 = sphi 0, %s22
    %s39 = sphi 0, %s23
    %s43 = sphi 0, %s43
    %s45 = sphi 0, %s43
    %s46 = sphi 0, %s45
    %s60 = sphi 0, %s46
    %s64 = sphi 0, %s64
    %s66 = sphi 0, %s64
    %s67 = sphi 0, %s66
    %s81 = sphi 0, %s67
    %s87 = sphi 0, %s89
    %s90 = sphi 0, %s87
    %s91 = sphi 0, %s90
    %s107 = sphi 0, %s91
  $region4: #{feed_forward_net.5} parent=0 // loop_header_branch
    %12 = sbr.rel (%p10) target = $region8
  $region5: #{feed_forward_net.5} parent=0 // loop_body
    %s14 = ssub.s32 %s9, 1
    %s15 = ssub.s32 %s9, 2
    %s16 = sadd.s32 %s9, 1
    %s17 = ssub.s32 %s9, %s16
    %p18 = scmp.eq.s32.totalorder %s17, 0
    %s20 = sadd.s32 %s19, 1
    %s21 = scalar_select %p18, %s19, %s20
    %p24 = pneg %p18
    %p25 = scmp.eq.s32.totalorder %s9, 1
    %p26 = por %p24, %p25
    %p27 = scmp.ne.s32.totalorder %s19, %s22
    %p28 = scmp.eq.s32.totalorder %s9, 0
    %p29 = por %p27, %p28
    %p30 = scmp.ne.s32.totalorder %s19, %s22
    %p31 = scmp.eq.s32.totalorder %s14, 1
    %p32 = por %p30, %p31
    %p33 = scmp.ne.s32.totalorder %s22, %s23
    %p34 = scmp.eq.s32.totalorder %s14, 0
    %p35 = por %p33, %p34
    %p36 = scmp.ne.s32.totalorder %s22, %s23
    %p37 = scmp.eq.s32.totalorder %s15, 1
    %p38 = por %p36, %p37
    %p40 = scmp.ne.s32.totalorder %s23, %s39
    %p41 = scmp.eq.s32.totalorder %s15, 0
    %p42 = por %p40, %p41
    %s44 = sadd.s32 %s43, 1
    %p47 = scmp.eq.s32.totalorder %s9, 1
    %p48 = scmp.ne.s32.totalorder %s43, %s45
    %p49 = scmp.eq.s32.totalorder %s9, 0
    %p50 = por %p48, %p49
    %p51 = scmp.ne.s32.totalorder %s43, %s45
    %p52 = scmp.eq.s32.totalorder %s14, 1
    %p53 = por %p51, %p52
    %p54 = scmp.ne.s32.totalorder %s45, %s46
    %p55 = scmp.eq.s32.totalorder %s14, 0
    %p56 = por %p54, %p55
    %p57 = scmp.ne.s32.totalorder %s45, %s46
    %p58 = scmp.eq.s32.totalorder %s15, 1
    %p59 = por %p57, %p58
    %p61 = scmp.ne.s32.totalorder %s46, %s60
    %p62 = scmp.eq.s32.totalorder %s15, 0
    %p63 = por %p61, %p62
    %s65 = sadd.s32 %s64, 1
    %p68 = scmp.eq.s32.totalorder %s9, 1
    %p69 = scmp.ne.s32.totalorder %s64, %s66
    %p70 = scmp.eq.s32.totalorder %s9, 0
    %p71 = por %p69, %p70
    %p72 = scmp.ne.s32.totalorder %s64, %s66
    %p73 = scmp.eq.s32.totalorder %s14, 1
    %p74 = por %p72, %p73
    %p75 = scmp.ne.s32.totalorder %s66, %s67
    %p76 = scmp.eq.s32.totalorder %s14, 0
    %p77 = por %p75, %p76
    %p78 = scmp.ne.s32.totalorder %s66, %s67
    %p79 = scmp.eq.s32.totalorder %s15, 1
    %p80 = por %p78, %p79
    %p82 = scmp.ne.s32.totalorder %s67, %s81
    %p83 = scmp.eq.s32.totalorder %s15, 0
    %p84 = por %p82, %p83
    %s85 = ssub.s32 %s9, %s16
    %p86 = scmp.eq.s32.totalorder %s85, 0
    %s88 = sadd.s32 %s87, 1
    %s89 = scalar_select %p86, %s87, %s88
    %p92 = pneg %p86
    %p93 = scmp.eq.s32.totalorder %s9, 1
    %p94 = por %p92, %p93
    %p95 = scmp.ne.s32.totalorder %s87, %s90
    %p96 = scmp.eq.s32.totalorder %s9, 0
    %p97 = por %p95, %p96
    %p98 = scmp.ne.s32.totalorder %s87, %s90
    %p99 = scmp.eq.s32.totalorder %s14, 1
    %p100 = por %p98, %p99
    %p101 = scmp.ne.s32.totalorder %s90, %s91
    %p102 = scmp.eq.s32.totalorder %s14, 0
    %p103 = por %p101, %p102
    %p104 = scmp.ne.s32.totalorder %s90, %s91
    %p105 = scmp.eq.s32.totalorder %s15, 1
    %p106 = por %p104, %p105
    %p108 = scmp.ne.s32.totalorder %s91, %s107
    %p109 = scmp.eq.s32.totalorder %s15, 0
    %p110 = por %p108, %p109
    %p111 = scmp.le.s32.totalorder 1, %s9
    %p112 = scmp.lt.s32.totalorder %s9, 3
    %p113 = pnand %p111, %p112
    %p114 = pneg %p113
    // Predicated region
    $region9: #{feed_forward_net.5} parent=5 // pred_check
      _
    $region10: #{feed_forward_net.5} parent=5 // pred_check_branch
      %116 = sbr.rel (%p113) target = $region12
    $region11: #{feed_forward_net.5} parent=5 // pred_region
      %s117 = ssub.s32 %s9, 1
      // Predicated region
      $region13: #{feed_forward_net.5} parent=11 // pred_check
        %p118 = pneg %p56
      $region14: #{feed_forward_net.5} parent=11 // pred_check_branch
        %120 = sbr.rel (%p118) target = $region16
      $region15: #{feed_forward_net.5} parent=11 // pred_region
        _
      $region16: #{feed_forward_net.5} parent=11 // pred_fallthru
        _
      // Predicated region
      $region17: #{feed_forward_net.5} parent=11 // pred_check
        %p121 = pneg %p77
      $region18: #{feed_forward_net.5} parent=11 // pred_check_branch
        %123 = sbr.rel (%p121) target = $region20
      $region19: #{feed_forward_net.5} parent=11 // pred_region
        _
      $region20: #{feed_forward_net.5} parent=11 // pred_fallthru
        _
    $region12: #{feed_forward_net.5} parent=5 // pred_fallthru
      _
    %p124 = scmp.lt.s32.totalorder %s9, 2
    // Predicated region
    $region21: #{feed_forward_net.5} parent=5 // pred_check
      %p125 = pneg %p124
    $region22: #{feed_forward_net.5} parent=5 // pred_check_branch
      %127 = sbr.rel (%p125) target = $region24
    $region23: #{feed_forward_net.5} parent=5 // pred_region
      // Predicated region
      $region25: #{feed_forward_net.5} parent=23 // pred_check
        %p128 = pneg %p29
      $region26: #{feed_forward_net.5} parent=23 // pred_check_branch
        %130 = sbr.rel (%p128) target = $region28
      $region27: #{feed_forward_net.5} parent=23 // pred_region
        %s131 = smul.u32 16, %s9
        %p132 = scmp.lt.s32.totalorder %s131, 31
        %s133 = scalar_select %p132, %s131, 31
        %s134 = smul.addr %s133, 4
        %s135 = scalar_lea.vmem %s0, %s134
        %s136 = smul.u32 16, %s9
      $region28: #{feed_forward_net.5} parent=23 // pred_fallthru
        _
    $region24: #{feed_forward_net.5} parent=5 // pred_fallthru
      _
    %p137 = scmp.le.s32.totalorder 1, %s9
    %p138 = scmp.lt.s32.totalorder %s9, 3
    %p139 = pnand %p137, %p138
    %p140 = pneg %p139
    // Predicated region
    $region29: #{feed_forward_net.5} parent=5 // pred_check
      _
    $region30: #{feed_forward_net.5} parent=5 // pred_check_branch
      %142 = sbr.rel (%p139) target = $region32
    $region31: #{feed_forward_net.5} parent=5 // pred_region
      %s143 = ssub.s32 %s9, 1
      %s144 = smul.u32 16, %s14
      %p145 = scmp.lt.s32.totalorder %s144, 31
      %s146 = scalar_select %p145, %s144, 31
      %s147 = smul.addr %s146, 4
      %s148 = scalar_lea.vmem %s0, %s147
      %p149 = pneg %p35
      %p150 = pneg %p32
      %p151 = pneg %p56
      %p152 = pneg %p53
      %p153 = pneg %p77
      %p154 = pneg %p74
      %p155 = pneg %p103
      %p156 = pneg %p100
      %s157 = smul.u32 16, %s14
      %p158 = scmp.lt.s32.totalorder %s157, 31
      %s159 = scalar_select %p158, %s157, 31
      %s160 = smul.addr %s159, 8
      %s161 = scalar_lea.vmem %s3, %s160
      %s162 = smul.u32 16, %s14
      %p163 = scmp.lt.s32.totalorder %s162, 31
      %s164 = scalar_select %p163, %s162, 31
      %s165 = smul.addr %s164, 4
      %s166 = scalar_lea.vmem %s0, %s165
      %s167 = smul.u32 16, %s14
      %s168 = smul.u32 16, %s14
      %p169 = scmp.lt.s32.totalorder %s168, 31
      %s170 = scalar_select %p169, %s168, 31
      %s171 = smul.addr %s170, 8
      %s172 = scalar_lea.vmem %s3, %s171
      %s173 = smul.u32 16, %s14
      %v175 = vld [vmem:[%s166] sm:$0xf]
      %v176 = vld [vmem:[%s166 + $0x4] sm:$0xf]
      %v177 = vld [vmem:[%s166 + $0x8] sm:$0xf]
      %v178 = vld [vmem:[%s166 + $0xc] sm:$0xf]
      %v179 = vld [vmem:[%s166 + $0x10] sm:$0xf]
      %v180 = vld [vmem:[%s166 + $0x14] sm:$0xf]
      %v181 = vld [vmem:[%s166 + $0x18] sm:$0xf]
      %v182 = vld [vmem:[%s166 + $0x1c] sm:$0xf]
      %v183 = vld [vmem:[%s166 + $0x20] sm:$0xf]
      %v184 = vld [vmem:[%s166 + $0x24] sm:$0xf]
      %v185 = vld [vmem:[%s166 + $0x28] sm:$0xf]
      %v186 = vld [vmem:[%s166 + $0x2c] sm:$0xf]
      %v187 = vld [vmem:[%s166 + $0x30] sm:$0xf]
      %v188 = vld [vmem:[%s166 + $0x34] sm:$0xf]
      %v189 = vld [vmem:[%s166 + $0x38] sm:$0xf]
      %v190 = vld [vmem:[%s166 + $0x3c] sm:$0xf]
      %v191 = vld [vmem:[%s1] sm:$0xf]
      %v192 = vld [vmem:[%s1 + $0x4] sm:$0xf]
      %v193 = vld [vmem:[%s1 + $0x8] sm:$0xf]
      %v194 = vld [vmem:[%s1 + $0xc] sm:$0xf]
      %v195 = vld [vmem:[%s1 + $0x10] sm:$0xf]
      %v196 = vld [vmem:[%s1 + $0x14] sm:$0xf]
      %v197 = vld [vmem:[%s1 + $0x18] sm:$0xf]
      %v198 = vld [vmem:[%s1 + $0x1c] sm:$0xf]
      %v199 = vld [vmem:[%s1 + $0x20] sm:$0xf]
      %v200 = vld [vmem:[%s1 + $0x24] sm:$0xf]
      %v201 = vld [vmem:[%s1 + $0x28] sm:$0xf]
      %v202 = vld [vmem:[%s1 + $0x2c] sm:$0xf]
      %v203 = vld [vmem:[%s1 + $0x30] sm:$0xf]
      %v204 = vld [vmem:[%s1 + $0x34] sm:$0xf]
      %v205 = vld [vmem:[%s1 + $0x38] sm:$0xf]
      %v206 = vld [vmem:[%s1 + $0x3c] sm:$0xf]
      %v207 = vld [vmem:[%s2] sm:$0x1]
      %v209 = vlaneseq
      %v210 = vshrl.u32 %v209, 7
      %v211 = vsub.s32 0, %v210
      %v212 = vrot.slane %v207, %v211
      %v230 = vunpack.c.l.b16 %v175
      %v231 = vunpack.c.l.b16 %v176
      %v232 = vunpack.c.l.b16 %v177
      %v233 = vunpack.c.l.b16 %v178
      %v234 = vunpack.c.l.b16 %v179
      %v235 = vunpack.c.l.b16 %v180
      %v236 = vunpack.c.l.b16 %v181
      %v237 = vunpack.c.l.b16 %v182
      %v238 = vunpack.c.l.b16 %v183
      %v239 = vunpack.c.l.b16 %v184
      %v240 = vunpack.c.l.b16 %v185
      %v241 = vunpack.c.l.b16 %v186
      %v242 = vunpack.c.l.b16 %v187
      %v243 = vunpack.c.l.b16 %v188
      %v244 = vunpack.c.l.b16 %v189
      %v245 = vunpack.c.l.b16 %v190
      %v246 = vpack.c.b16 %v231, %v230
      %v247 = vpack.c.b16 %v233, %v232
      %v248 = vpack.c.b16 %v235, %v234
      %v249 = vpack.c.b16 %v237, %v236
      %v250 = vpack.c.b16 %v239, %v238
      %v251 = vpack.c.b16 %v241, %v240
      %v252 = vpack.c.b16 %v243, %v242
      %v253 = vpack.c.b16 %v245, %v244
      %v278 = vunpack.c.l.b16 %v191
      %v279 = vunpack.c.l.b16 %v192
      %v280 = vunpack.c.l.b16 %v193
      %v281 = vunpack.c.l.b16 %v194
      %v282 = vunpack.c.l.b16 %v195
      %v283 = vunpack.c.l.b16 %v196
      %v284 = vunpack.c.l.b16 %v197
      %v285 = vunpack.c.l.b16 %v198
      %v286 = vunpack.c.l.b16 %v199
      %v287 = vunpack.c.l.b16 %v200
      %v288 = vunpack.c.l.b16 %v201
      %v289 = vunpack.c.l.b16 %v202
      %v290 = vunpack.c.l.b16 %v203
      %v291 = vunpack.c.l.b16 %v204
      %v292 = vunpack.c.l.b16 %v205
      %v293 = vunpack.c.l.b16 %v206
      %v294 = vpack.c.b16 %v279, %v278
      %v295 = vpack.c.b16 %v281, %v280
      %v296 = vpack.c.b16 %v283, %v282
      %v297 = vpack.c.b16 %v285, %v284
      %v298 = vpack.c.b16 %v287, %v286
      %v299 = vpack.c.b16 %v289, %v288
      %v300 = vpack.c.b16 %v291, %v290
      %v301 = vpack.c.b16 %v293, %v292
      %310 = vmatprep.subr.bf16.mxu0 0
      %311 = vmatpush1.bf16.msra.mxu0 %v301
      %312 = vmatprep.subr.bf16.mxu0 0
      %313 = vmatpush1.bf16.msra.mxu0 %v300
      %314 = vmatprep.subr.bf16.mxu0 0
      %315 = vmatpush1.bf16.msra.mxu0 %v299
      %316 = vmatprep.subr.bf16.mxu0 0
      %317 = vmatpush1.bf16.msra.mxu0 %v298
      %318 = vmatprep.subr.bf16.mxu0 0
      %319 = vmatpush1.bf16.msra.mxu0 %v297
      %320 = vmatprep.subr.bf16.mxu0 0
      %321 = vmatpush1.bf16.msra.mxu0 %v296
      %322 = vmatprep.subr.bf16.mxu0 0
      %323 = vmatpush1.bf16.msra.mxu0 %v295
      %324 = vmatprep.subr.bf16.mxu0 0
      %325 = vmatpush1.bf16.msra.mxu0 %v294
      %326 = vmatprep.subr.bf16.mxu0 0
      %327 = vmatpush2.bf16.msra.mxu0 0
      %328 = vmatprep.subr.bf16.mxu0 0
      %329 = vmatpush2.bf16.msra.mxu0 0
      %330 = vmatprep.subr.bf16.mxu0 0
      %331 = vmatpush2.bf16.msra.mxu0 0
      %332 = vmatprep.subr.bf16.mxu0 0
      %333 = vmatpush2.bf16.msra.mxu0 0
      %334 = vmatprep.subr.bf16.mxu0 0
      %335 = vmatpush2.bf16.msra.mxu0 0
      %336 = vmatprep.subr.bf16.mxu0 0
      %337 = vmatpush2.bf16.msra.mxu0 0
      %338 = vmatprep.subr.bf16.mxu0 0
      %339 = vmatpush2.bf16.msra.mxu0 0
      %340 = vmatprep.subr.bf16.mxu0 0
      %341 = vmatpush2.bf16.msra.mxu0 0
      %342 = vmatprep.mubr.bf16.mxu0 0
      %343 = vmatmul.mubr.bf16.gmra.mxu0 %v246
      %v344 = vpop.f32.mrf.mxu0
      %v345 = vadd.f32 %v212, %v344
      %v346 = vpop.f32.mrf.mxu0
      %v347 = vpop.f32.mrf.mxu0
      %v348 = vadd.f32 %v212, %v347
      %v349 = vpop.f32.mrf.mxu0
      %350 = vmatprep.mubr.bf16.mxu0 0
      %351 = vmatmul.mubr.bf16.gmra.mxu0 %v247
      %v352 = vpop.f32.mrf.mxu0
      %v353 = vadd.f32 %v212, %v352
      %v354 = vpop.f32.mrf.mxu0
      %v355 = vpop.f32.mrf.mxu0
      %v356 = vadd.f32 %v212, %v355
      %v357 = vpop.f32.mrf.mxu0
      %358 = vmatprep.mubr.bf16.mxu0 0
      %359 = vmatmul.mubr.bf16.gmra.mxu0 %v248
      %v360 = vpop.f32.mrf.mxu0
      %v361 = vadd.f32 %v212, %v360
      %v362 = vpop.f32.mrf.mxu0
      %v363 = vpop.f32.mrf.mxu0
      %v364 = vadd.f32 %v212, %v363
      %v365 = vpop.f32.mrf.mxu0
      %366 = vmatprep.mubr.bf16.mxu0 0
      %367 = vmatmul.mubr.bf16.gmra.mxu0 %v249
      %v368 = vpop.f32.mrf.mxu0
      %v369 = vadd.f32 %v212, %v368
      %v370 = vpop.f32.mrf.mxu0
      %v371 = vpop.f32.mrf.mxu0
      %v372 = vadd.f32 %v212, %v371
      %v373 = vpop.f32.mrf.mxu0
      %374 = vmatprep.mubr.bf16.mxu0 0
      %375 = vmatmul.mubr.bf16.gmra.mxu0 %v250
      %v376 = vpop.f32.mrf.mxu0
      %v377 = vadd.f32 %v212, %v376
      %v378 = vpop.f32.mrf.mxu0
      %v379 = vpop.f32.mrf.mxu0
      %v380 = vadd.f32 %v212, %v379
      %v381 = vpop.f32.mrf.mxu0
      %382 = vmatprep.mubr.bf16.mxu0 0
      %383 = vmatmul.mubr.bf16.gmra.mxu0 %v251
      %v384 = vpop.f32.mrf.mxu0
      %v385 = vadd.f32 %v212, %v384
      %v386 = vpop.f32.mrf.mxu0
      %v387 = vpop.f32.mrf.mxu0
      %v388 = vadd.f32 %v212, %v387
      %v389 = vpop.f32.mrf.mxu0
      %390 = vmatprep.mubr.bf16.mxu0 0
      %391 = vmatmul.mubr.bf16.gmra.mxu0 %v252
      %v392 = vpop.f32.mrf.mxu0
      %v393 = vadd.f32 %v212, %v392
      %v394 = vpop.f32.mrf.mxu0
      %v395 = vpop.f32.mrf.mxu0
      %v396 = vadd.f32 %v212, %v395
      %v397 = vpop.f32.mrf.mxu0
      %398 = vmatprep.mubr.bf16.mxu0 0
      %399 = vmatmul.mubr.bf16.gmra.mxu0 %v253
      %v400 = vpop.f32.mrf.mxu0
      %v401 = vadd.f32 %v212, %v400
      %v402 = vpop.f32.mrf.mxu0
      %v403 = vpop.f32.mrf.mxu0
      %v404 = vadd.f32 %v212, %v403
      %v405 = vpop.f32.mrf.mxu0
      %406 = vdwg.mxu0
      %407 = vst [vmem:[%s172] sm:$0xff] %v345
      %408 = vst [vmem:[%s172 + $0x8] sm:$0xff] %v348
      %409 = vst [vmem:[%s172 + $0x10] sm:$0xff] %v353
      %410 = vst [vmem:[%s172 + $0x18] sm:$0xff] %v356
      %411 = vst [vmem:[%s172 + $0x20] sm:$0xff] %v361
      %412 = vst [vmem:[%s172 + $0x28] sm:$0xff] %v364
      %413 = vst [vmem:[%s172 + $0x30] sm:$0xff] %v369
      %414 = vst [vmem:[%s172 + $0x38] sm:$0xff] %v372
      %415 = vst [vmem:[%s172 + $0x40] sm:$0xff] %v377
      %416 = vst [vmem:[%s172 + $0x48] sm:$0xff] %v380
      %417 = vst [vmem:[%s172 + $0x50] sm:$0xff] %v385
      %418 = vst [vmem:[%s172 + $0x58] sm:$0xff] %v388
      %419 = vst [vmem:[%s172 + $0x60] sm:$0xff] %v393
      %420 = vst [vmem:[%s172 + $0x68] sm:$0xff] %v396
      %421 = vst [vmem:[%s172 + $0x70] sm:$0xff] %v401
      %422 = vst [vmem:[%s172 + $0x78] sm:$0xff] %v404
      %s423 = smul.u32 16, %s14
      %p424 = scmp.lt.s32.totalorder %s423, 31
      %s425 = scalar_select %p424, %s423, 31
      %s426 = smul.addr %s425, 8
      %s427 = scalar_lea.vmem %s3, %s426
      // Predicated region
      $region33: #{feed_forward_net.5} parent=31 // pred_check
        %p428 = pneg %p100
      $region34: #{feed_forward_net.5} parent=31 // pred_check_branch
        %430 = sbr.rel (%p428) target = $region36
      $region35: #{feed_forward_net.5} parent=31 // pred_region
        %s431 = smul.u32 16, %s14
      $region36: #{feed_forward_net.5} parent=31 // pred_fallthru
        _
    $region32: #{feed_forward_net.5} parent=5 // pred_fallthru
      _
    %p432 = scmp.le.s32.totalorder 2, %s9
    // Predicated region
    $region37: #{feed_forward_net.5} parent=5 // pred_check
      %p433 = pneg %p432
    $region38: #{feed_forward_net.5} parent=5 // pred_check_branch
      %435 = sbr.rel (%p433) target = $region40
    $region39: #{feed_forward_net.5} parent=5 // pred_region
      %s436 = ssub.s32 %s9, 2
      // Predicated region
      $region41: #{feed_forward_net.5} parent=39 // pred_check
        %p437 = pneg %p106
      $region42: #{feed_forward_net.5} parent=39 // pred_check_branch
        %439 = sbr.rel (%p437) target = $region44
      $region43: #{feed_forward_net.5} parent=39 // pred_region
        %s440 = smul.u32 16, %s15
        %p441 = scmp.lt.s32.totalorder %s440, 31
        %s442 = scalar_select %p441, %s440, 31
        %s443 = smul.addr %s442, 8
        %s444 = scalar_lea.vmem %s3, %s443
      $region44: #{feed_forward_net.5} parent=39 // pred_fallthru
        _
    $region40: #{feed_forward_net.5} parent=5 // pred_fallthru
      _
  $region6: #{feed_forward_net.5} parent=0 // loop_footer
    %s13 = sadd.s32 1, %s9
  $region7: #{feed_forward_net.5} parent=0 // loop_footer_branch
    %8 = sbr.rel target = $region3
  $region8: #{feed_forward_net.5} parent=0 // loop_exit
    _

</llo_original>
